<compile_context>
chip_gen: v7x
topology: tpu7x:2x2x1
jax: 0.10.0
libtpu: 0.0.40
codegen_flags: <defaults>
</compile_context>

<pallas_src>
import functools
import math

import jax
import jax.numpy as jnp
import numpy as np
from jax.experimental import pallas as pl
from jax.experimental.pallas import tpu as pltpu


def _triplet_hinge_kernel(e_blk_ref, eT_ref, sqc_ref, sqr_ref, labc_ref, labr_ref,
                          idxc_ref, idxr_ref, hinge_ref, ap_ref, an_ref, col0_ref,
                          *, margin, soft, metric):
    i = pl.program_id(0)          # row-block index ("parallel")
    j = pl.program_id(1)          # column-tile index ("arbitrary", reduction)
    nj = pl.num_programs(1)
    tm = e_blk_ref.shape[0]
    tn = eT_ref.shape[1]

    neg_inf = jnp.float32(-jnp.inf)
    pos_inf = jnp.float32(jnp.inf)

    @pl.when(j == 0)
    def _():
        ap_ref[...] = jnp.full_like(ap_ref, neg_inf)   # running max over positives
        an_ref[...] = jnp.full_like(an_ref, pos_inf)   # running min over negatives

    # (tm, tn) Gram tile on the MXU: bf16 x bf16 (pre-transposed RHS) -> f32 acc.
    gram = jnp.dot(e_blk_ref[...], eT_ref[...], preferred_element_type=jnp.float32)

    # Squared-euclidean distances via the norm trick.  sqrt is monotone, so hard
    # mining over d2 selects the same triplets as torch.cdist in the reference.
    d2 = jnp.maximum(sqc_ref[...] + sqr_ref[...] - 2.0 * gram, 0.0)   # (tm, tn)

    @pl.when(j == 0)
    def _():
        # np.argmax/argmin over an all -inf/+inf row returns index 0, so rows with
        # no valid positive / no valid negative fall back to embeds[0].
        col0_ref[...] = d2[:, 0:1]

    same = labc_ref[...] == labr_ref[...]          # (tm, tn) label equality
    pos_base = jnp.where(same, d2, neg_inf)        # candidate positive distances

    # Hardest positive: must exclude the diagonal.  Only tiles whose column range
    # intersects this row block's diagonal need the index compare.
    row0 = i * tm
    cstart = j * tn
    has_diag = jnp.logical_and(row0 < cstart + tn, cstart < row0 + tm)

    @pl.when(jnp.logical_not(has_diag))
    def _():
        ap_ref[...] = jnp.maximum(ap_ref[...],
                                  jnp.max(pos_base, axis=1, keepdims=True))

    @pl.when(has_diag)
    def _():
        not_diag = idxc_ref[...] != idxr_ref[...]
        pos_d = jnp.where(not_diag, pos_base, neg_inf)
        ap_ref[...] = jnp.maximum(ap_ref[...],
                                  jnp.max(pos_d, axis=1, keepdims=True))

    # Hardest negative: different label.  Padded columns carry a sentinel label
    # (always "different") but have d2 = +inf, so they never win the min.  The
    # diagonal has the same label, so it is excluded automatically.
    neg_d = jnp.where(same, pos_inf, d2)
    an_ref[...] = jnp.minimum(an_ref[...], jnp.min(neg_d, axis=1, keepdims=True))

    @pl.when(j == nj - 1)
    def _():
        ap = ap_ref[...]
        an = an_ref[...]
        c0 = col0_ref[...]
        ap = jnp.where(ap == neg_inf, c0, ap)      # row had no valid positive
        an = jnp.where(an == pos_inf, c0, an)      # row had no valid negative
        if metric == "euclidean":
            ap = jnp.sqrt(ap + 1e-12)
            an = jnp.sqrt(an + 1e-12)
        diff = ap - an
        if soft:
            # softplus(diff) for margin == 'soft'
            hinge = jnp.maximum(diff, 0.0) + jnp.log(1.0 + jnp.exp(-jnp.abs(diff)))
        else:
            hinge = jnp.maximum(diff + jnp.float32(margin), 0.0)
        hinge_ref[...] = hinge


@functools.partial(
    jax.jit,
    static_argnames=("margin", "metric", "block_rows", "block_cols", "mxu_dtype"))
def triplet_loss(embeds, labels, margin=0.5, metric="sqeuclidean",
                 block_rows=256, block_cols=512, mxu_dtype=jnp.bfloat16):
    """embeds: (N, D) float, labels: (N,) int.  Returns scalar loss (float32)."""
    n, d = embeds.shape

    soft = isinstance(margin, str) and margin.lower() == "soft"
    if not soft and not isinstance(margin, (int, float)):
        raise NotImplementedError("margin must be a float or 'soft'")
    if metric not in ("sqeuclidean", "euclidean"):
        # TODO(synk): 'cityblock' needs an L1 pairwise kernel (no norm trick).
        raise NotImplementedError("metric %s not implemented" % metric)

    # Tile sizes: multiples of 128, clamped to the (128-padded) problem size.
    n128 = -(-n // 128) * 128
    tm = (max(128, min(int(block_rows), n128)) // 128) * 128
    tn = (max(128, min(int(block_cols), n128)) // 128) * 128
    lcm = tm * tn // math.gcd(tm, tn)
    n_pad = -(-n // lcm) * lcm
    d_pad = -(-d // 128) * 128

    # Pad, quantize for the MXU, and pre-transpose the RHS once in HBM so the
    # kernel's column tiles (d_pad, tn) are lane-dense with a (1,0) contraction.
    e = jnp.pad(embeds.astype(jnp.float32), ((0, n_pad - n), (0, d_pad - d)))
    e_mxu = e.astype(mxu_dtype)
    eT_mxu = e_mxu.T                                   # (d_pad, n_pad)

    ef = e_mxu.astype(jnp.float32)                     # norms at MXU-input precision
    sq = jnp.sum(ef * ef, axis=1)                      # (n_pad,)
    col_is_real = jnp.arange(n_pad) < n
    sq_col = sq.reshape(n_pad, 1)
    # +inf on padded columns -> d2 = +inf there -> auto-excluded from the neg min.
    sq_row = jnp.where(col_is_real, sq, jnp.inf).reshape(1, n_pad)

    lab = labels.astype(jnp.int32)
    # Sentinel outside the real label range (works for negative labels too).
    pad_label = jnp.min(lab) - 1
    lab = jnp.where(col_is_real, jnp.pad(lab, (0, n_pad - n)), pad_label)
    lab_col = lab.reshape(n_pad, 1)
    lab_row = lab.reshape(1, n_pad)

    idx = jnp.arange(n_pad, dtype=jnp.int32)
    idx_col = idx.reshape(n_pad, 1)
    idx_row = idx.reshape(1, n_pad)

    kernel = functools.partial(_triplet_hinge_kernel,
                               margin=0.0 if soft else float(margin),
                               soft=soft, metric=metric)

    # VMEM budget: double-buffered bf16 operands + f32 full-tile intermediates.
    mxu_bytes = jnp.dtype(mxu_dtype).itemsize
    vmem_est = (2 * tm * d_pad * mxu_bytes          # anchor row block (x2 bufs)
                + 2 * d_pad * tn * mxu_bytes        # transposed column tile (x2 bufs)
                + 12 * tm * tn * 4                  # gram/d2/mask/select temps
                + 12 * (tm + tn) * 4                # small per-row/col vectors
                + 8 * tm * 4)                       # output + scratch accumulators
    vmem_limit = int(min(max(vmem_est * 5 // 4 + (2 << 20), 16 << 20), 64 << 20))

    cost = pl.CostEstimate(
        flops=2 * n_pad * n_pad * d_pad,
        transcendentals=n_pad if soft else 0,
        bytes_accessed=(n_pad * d_pad * mxu_bytes
                        + (n_pad // tm) * n_pad * d_pad * mxu_bytes
                        + 7 * n_pad * 4))

    hinge = pl.pallas_call(
        kernel,
        out_shape=jax.ShapeDtypeStruct((n_pad, 1), jnp.float32),
        grid=(n_pad // tm, n_pad // tn),
        in_specs=[
            pl.BlockSpec((tm, d_pad), lambda i, j: (i, 0)),   # anchor row block (bf16)
            pl.BlockSpec((d_pad, tn), lambda i, j: (0, j)),   # pre-transposed RHS tile (bf16)
            pl.BlockSpec((tm, 1), lambda i, j: (i, 0)),       # ||e_i||^2
            pl.BlockSpec((1, tn), lambda i, j: (0, j)),       # ||e_j||^2 (+inf on pads)
            pl.BlockSpec((tm, 1), lambda i, j: (i, 0)),       # labels (rows)
            pl.BlockSpec((1, tn), lambda i, j: (0, j)),       # labels (cols, sentinel pads)
            pl.BlockSpec((tm, 1), lambda i, j: (i, 0)),       # row indices (diag mask)
            pl.BlockSpec((1, tn), lambda i, j: (0, j)),       # col indices (diag mask)
        ],
        out_specs=pl.BlockSpec((tm, 1), lambda i, j: (i, 0)),
        scratch_shapes=[pltpu.VMEM((tm, 1), jnp.float32),     # running max positive d2
                        pltpu.VMEM((tm, 1), jnp.float32),     # running min negative d2
                        pltpu.VMEM((tm, 1), jnp.float32)],    # d2 to column 0 (fallback)
        compiler_params=pltpu.CompilerParams(
            dimension_semantics=("parallel", "arbitrary"),
            vmem_limit_bytes=vmem_limit),
        cost_estimate=cost,
    )(e_mxu, eT_mxu, sq_col, sq_row, lab_col, lab_row, idx_col, idx_row)

    return jnp.mean(hinge[:n, 0])


def _reference_loss(embeds, labels, margin=0.5):
    """Pure-numpy mirror of the PyTorch forward (for validation)."""
    e = np.asarray(embeds, dtype=np.float32)
    lab = np.asarray(labels).reshape(-1, 1)
    n = lab.shape[0]
    dist = np.sqrt(np.maximum(((e[:, None, :] - e[None, :, :]) ** 2).sum(-1), 0.0))
    lb_eqs = lab == lab.T
    dia = np.diag_indices(n)
    lb_eqs[dia] = False
    dist_same = dist.copy()
    dist_same[lb_eqs == False] = -np.inf
    pos_idx = np.argmax(dist_same, axis=1)
    dist_diff = dist.copy()
    lb_eqs[dia] = True
    dist_diff[lb_eqs == True] = np.inf
    neg_idx = np.argmin(dist_diff, axis=1)
    pos, neg = e[pos_idx], e[neg_idx]
    ap = ((e - pos) ** 2).sum(1)
    an = ((e - neg) ** 2).sum(1)
    return float(np.maximum(ap - an + margin, 0.0).mean())


if __name__ == "__main__":
    key = jax.random.PRNGKey(0)
    n, d = 8, 32                       # small batch of 8 embeddings, dim 32
    embeds = jax.random.normal(key, (n, d), dtype=jnp.float32)
    labels = jnp.array([0, 0, 1, 1, 2, 2, 3, 3], dtype=jnp.int32)

    loss = triplet_loss(embeds, labels, margin=0.5)
    jax.block_until_ready(loss)
    loss_val = float(loss)

    # Reference with the same bf16 input quantization the MXU path sees (tight check).
    embeds_bf16 = np.asarray(embeds.astype(jnp.bfloat16).astype(jnp.float32))
    ref_bf16 = _reference_loss(embeds_bf16, np.asarray(labels), margin=0.5)
    # Full-precision reference (loose check; bf16 MXU inputs cost ~1e-3 rel error).
    ref_f32 = _reference_loss(np.asarray(embeds), np.asarray(labels), margin=0.5)

    assert np.isfinite(loss_val), loss_val
    assert np.allclose(loss_val, ref_bf16, rtol=1e-3, atol=1e-5), (loss_val, ref_bf16)
    assert np.allclose(loss_val, ref_f32, rtol=5e-2, atol=1e-3), (loss_val, ref_f32)
    print("KERNEL_OK")
</pallas_src>

<mosaic_0001>
module attributes {stable_mosaic.version = 11 : i64} {
  func.func @_triplet_hinge_kernel(%arg0: i32, %arg1: i32, %arg2: memref<128x128xbf16, #tpu.memory_space<vmem>>, %arg3: memref<128x128xbf16, #tpu.memory_space<vmem>>, %arg4: memref<128x1xf32, #tpu.memory_space<vmem>>, %arg5: memref<1x128xf32, #tpu.memory_space<vmem>>, %arg6: memref<128x1xi32, #tpu.memory_space<vmem>>, %arg7: memref<1x128xi32, #tpu.memory_space<vmem>>, %arg8: memref<128x1xi32, #tpu.memory_space<vmem>>, %arg9: memref<1x128xi32, #tpu.memory_space<vmem>>, %arg10: memref<128x1xf32, #tpu.memory_space<vmem>>, %arg11: memref<128x1xf32, #tpu.memory_space<vmem>>, %arg12: memref<128x1xf32, #tpu.memory_space<vmem>>, %arg13: memref<128x1xf32, #tpu.memory_space<vmem>>) attributes {dimension_semantics = [#tpu.dimension_semantics<parallel>, #tpu.dimension_semantics<arbitrary>], iteration_bounds = array<i64: 1, 1>, scalar_prefetch = 0 : i64, scratch_operands = 3 : i64, tpu.core_type = #tpu.core_type<tc>, window_params = [{transform_indices = @transform_0, window_bounds = array<i64: 128, 128>}, {transform_indices = @transform_1, window_bounds = array<i64: 128, 128>}, {transform_indices = @transform_2, window_bounds = array<i64: 128, 1>}, {transform_indices = @transform_3, window_bounds = array<i64: 1, 128>}, {transform_indices = @transform_4, window_bounds = array<i64: 128, 1>}, {transform_indices = @transform_5, window_bounds = array<i64: 1, 128>}, {transform_indices = @transform_6, window_bounds = array<i64: 128, 1>}, {transform_indices = @transform_7, window_bounds = array<i64: 1, 128>}, {transform_indices = @transform_8, window_bounds = array<i64: 128, 1>}]} {
    %c0_i32 = arith.constant 0 : i32
    %0 = arith.cmpi eq, %arg1, %c0_i32 : i32
    %1 = arith.extui %0 : i1 to i32
    %cst = arith.constant 0xFF800000 : f32
    %cst_0 = arith.constant 0x7F800000 : f32
    %c0_i32_1 = arith.constant 0 : i32
    %2 = arith.cmpi ne, %1, %c0_i32_1 : i32
    scf.if %2 {
      %48 = vector.broadcast %cst : f32 to vector<128x1xf32>
      %c0_35 = arith.constant 0 : index
      %c0_36 = arith.constant 0 : index
      %49 = vector.load %arg11[%c0_35, %c0_36] : memref<128x1xf32, #tpu.memory_space<vmem>>, vector<128x1xf32>
      tpu.vector_store %arg11[%c0_35, %c0_36], %48 {strides = array<i32>} : memref<128x1xf32, #tpu.memory_space<vmem>>, vector<128x1xf32>,
      %50 = vector.broadcast %cst_0 : f32 to vector<128x1xf32>
      %c0_37 = arith.constant 0 : index
      %c0_38 = arith.constant 0 : index
      %51 = vector.load %arg12[%c0_37, %c0_38] : memref<128x1xf32, #tpu.memory_space<vmem>>, vector<128x1xf32>
      tpu.vector_store %arg12[%c0_37, %c0_38], %50 {strides = array<i32>} : memref<128x1xf32, #tpu.memory_space<vmem>>, vector<128x1xf32>,
    } else {
    }
    %c0 = arith.constant 0 : index
    %c0_2 = arith.constant 0 : index
    %3 = vector.load %arg2[%c0, %c0_2] : memref<128x128xbf16, #tpu.memory_space<vmem>>, vector<128x128xbf16>
    %c0_3 = arith.constant 0 : index
    %c0_4 = arith.constant 0 : index
    %4 = vector.load %arg3[%c0_3, %c0_4] : memref<128x128xbf16, #tpu.memory_space<vmem>>, vector<128x128xbf16>
    %cst_5 = arith.constant dense<0.000000e+00> : vector<128x128xf32>
    %5 = tpu.matmul %3, %4, %cst_5 {dimension_numbers = #tpu.dot_dimension_numbers<[1], [0], [0], [1], [0, 0, 1, 1], [], []>} : vector<128x128xbf16>, vector<128x128xbf16>, vector<128x128xf32> -> vector<128x128xf32>
    %c0_6 = arith.constant 0 : index
    %c0_7 = arith.constant 0 : index
    %6 = vector.load %arg4[%c0_6, %c0_7] : memref<128x1xf32, #tpu.memory_space<vmem>>, vector<128x1xf32>
    %c0_8 = arith.constant 0 : index
    %c0_9 = arith.constant 0 : index
    %7 = vector.load %arg5[%c0_8, %c0_9] : memref<1x128xf32, #tpu.memory_space<vmem>>, vector<1x128xf32>
    %8 = vector.broadcast %6 : vector<128x1xf32> to vector<128x128xf32>
    %9 = vector.broadcast %7 : vector<1x128xf32> to vector<128x128xf32>
    %10 = arith.addf %8, %9 : vector<128x128xf32>
    %cst_10 = arith.constant 2.000000e+00 : f32
    %11 = vector.broadcast %cst_10 : f32 to vector<128x128xf32>
    %12 = arith.mulf %11, %5 : vector<128x128xf32>
    %13 = arith.subf %10, %12 : vector<128x128xf32>
    %cst_11 = arith.constant 0.000000e+00 : f32
    %14 = vector.broadcast %cst_11 : f32 to vector<128x128xf32>
    %15 = arith.maximumf %13, %14 : vector<128x128xf32>
    %c0_i32_12 = arith.constant 0 : i32
    %16 = arith.cmpi eq, %arg1, %c0_i32_12 : i32
    %17 = arith.extui %16 : i1 to i32
    %c0_i32_13 = arith.constant 0 : i32
    %18 = arith.cmpi ne, %17, %c0_i32_13 : i32
    scf.if %18 {
      %48 = vector.extract_strided_slice %15 {offsets = [0, 0], sizes = [128, 1], strides = [1, 1]} : vector<128x128xf32> to vector<128x1xf32>
      %c0_35 = arith.constant 0 : index
      %c0_36 = arith.constant 0 : index
      %49 = vector.load %arg13[%c0_35, %c0_36] : memref<128x1xf32, #tpu.memory_space<vmem>>, vector<128x1xf32>
      tpu.vector_store %arg13[%c0_35, %c0_36], %48 {strides = array<i32>} : memref<128x1xf32, #tpu.memory_space<vmem>>, vector<128x1xf32>,
    } else {
    }
    %c0_14 = arith.constant 0 : index
    %c0_15 = arith.constant 0 : index
    %19 = vector.load %arg6[%c0_14, %c0_15] : memref<128x1xi32, #tpu.memory_space<vmem>>, vector<128x1xi32>
    %c0_16 = arith.constant 0 : index
    %c0_17 = arith.constant 0 : index
    %20 = vector.load %arg7[%c0_16, %c0_17] : memref<1x128xi32, #tpu.memory_space<vmem>>, vector<1x128xi32>
    %21 = vector.broadcast %19 : vector<128x1xi32> to vector<128x128xi32>
    %22 = vector.broadcast %20 : vector<1x128xi32> to vector<128x128xi32>
    %23 = arith.cmpi eq, %21, %22 : vector<128x128xi32>
    %cst_18 = arith.constant 0xFF800000 : f32
    %24 = vector.broadcast %cst_18 : f32 to vector<128x128xf32>
    %25 = arith.select %23, %15, %24 : vector<128x128xi1>, vector<128x128xf32>
    %c128_i32 = arith.constant 128 : i32
    %26 = arith.muli %arg0, %c128_i32 : i32
    %c128_i32_19 = arith.constant 128 : i32
    %27 = arith.muli %arg1, %c128_i32_19 : i32
    %c128_i32_20 = arith.constant 128 : i32
    %28 = arith.addi %27, %c128_i32_20 : i32
    %29 = arith.cmpi slt, %26, %28 : i32
    %c128_i32_21 = arith.constant 128 : i32
    %30 = arith.addi %26, %c128_i32_21 : i32
    %31 = arith.cmpi slt, %27, %30 : i32
    %32 = arith.andi %29, %31 : i1
    %true = arith.constant true
    %33 = arith.xori %32, %true : i1
    %34 = arith.extui %33 : i1 to i32
    %c0_i32_22 = arith.constant 0 : i32
    %35 = arith.cmpi ne, %34, %c0_i32_22 : i32
    scf.if %35 {
      %c0_35 = arith.constant 0 : index
      %c0_36 = arith.constant 0 : index
      %48 = vector.load %arg11[%c0_35, %c0_36] : memref<128x1xf32, #tpu.memory_space<vmem>>, vector<128x1xf32>
      %cst_37 = arith.constant dense<0xFF800000> : vector<128xf32>
      %49 = vector.multi_reduction <maximumf>, %25, %cst_37 [1] : vector<128x128xf32> to vector<128xf32>
      %50 = vector.shape_cast %49 : vector<128xf32> to vector<128x1xf32>
      %51 = arith.maximumf %48, %50 : vector<128x1xf32>
      %c0_38 = arith.constant 0 : index
      %c0_39 = arith.constant 0 : index
      %52 = vector.load %arg11[%c0_38, %c0_39] : memref<128x1xf32, #tpu.memory_space<vmem>>, vector<128x1xf32>
      tpu.vector_store %arg11[%c0_38, %c0_39], %51 {strides = array<i32>} : memref<128x1xf32, #tpu.memory_space<vmem>>, vector<128x1xf32>,
    } else {
    }
    %36 = arith.extui %32 : i1 to i32
    %cst_23 = arith.constant 0xFF800000 : f32
    %c0_i32_24 = arith.constant 0 : i32
    %37 = arith.cmpi ne, %36, %c0_i32_24 : i32
    scf.if %37 {
      %c0_35 = arith.constant 0 : index
      %c0_36 = arith.constant 0 : index
      %48 = vector.load %arg8[%c0_35, %c0_36] : memref<128x1xi32, #tpu.memory_space<vmem>>, vector<128x1xi32>
      %c0_37 = arith.constant 0 : index
      %c0_38 = arith.constant 0 : index
      %49 = vector.load %arg9[%c0_37, %c0_38] : memref<1x128xi32, #tpu.memory_space<vmem>>, vector<1x128xi32>
      %50 = vector.broadcast %48 : vector<128x1xi32> to vector<128x128xi32>
      %51 = vector.broadcast %49 : vector<1x128xi32> to vector<128x128xi32>
      %52 = arith.cmpi ne, %50, %51 : vector<128x128xi32>
      %53 = vector.broadcast %cst_23 : f32 to vector<128x128xf32>
      %54 = arith.select %52, %25, %53 : vector<128x128xi1>, vector<128x128xf32>
      %c0_39 = arith.constant 0 : index
      %c0_40 = arith.constant 0 : index
      %55 = vector.load %arg11[%c0_39, %c0_40] : memref<128x1xf32, #tpu.memory_space<vmem>>, vector<128x1xf32>
      %cst_41 = arith.constant dense<0xFF800000> : vector<128xf32>
      %56 = vector.multi_reduction <maximumf>, %54, %cst_41 [1] : vector<128x128xf32> to vector<128xf32>
      %57 = vector.shape_cast %56 : vector<128xf32> to vector<128x1xf32>
      %58 = arith.maximumf %55, %57 : vector<128x1xf32>
      %c0_42 = arith.constant 0 : index
      %c0_43 = arith.constant 0 : index
      %59 = vector.load %arg11[%c0_42, %c0_43] : memref<128x1xf32, #tpu.memory_space<vmem>>, vector<128x1xf32>
      tpu.vector_store %arg11[%c0_42, %c0_43], %58 {strides = array<i32>} : memref<128x1xf32, #tpu.memory_space<vmem>>, vector<128x1xf32>,
    } else {
    }
    %cst_25 = arith.constant 0x7F800000 : f32
    %38 = vector.broadcast %cst_25 : f32 to vector<128x128xf32>
    %39 = arith.select %23, %38, %15 : vector<128x128xi1>, vector<128x128xf32>
    %c0_26 = arith.constant 0 : index
    %c0_27 = arith.constant 0 : index
    %40 = vector.load %arg12[%c0_26, %c0_27] : memref<128x1xf32, #tpu.memory_space<vmem>>, vector<128x1xf32>
    %cst_28 = arith.constant dense<0x7F800000> : vector<128xf32>
    %41 = vector.multi_reduction <minimumf>, %39, %cst_28 [1] : vector<128x128xf32> to vector<128xf32>
    %42 = vector.shape_cast %41 : vector<128xf32> to vector<128x1xf32>
    %43 = arith.minimumf %40, %42 : vector<128x1xf32>
    %c0_29 = arith.constant 0 : index
    %c0_30 = arith.constant 0 : index
    %44 = vector.load %arg12[%c0_29, %c0_30] : memref<128x1xf32, #tpu.memory_space<vmem>>, vector<128x1xf32>
    tpu.vector_store %arg12[%c0_29, %c0_30], %43 {strides = array<i32>} : memref<128x1xf32, #tpu.memory_space<vmem>>, vector<128x1xf32>,
    %c0_i32_31 = arith.constant 0 : i32
    %45 = arith.cmpi eq, %arg1, %c0_i32_31 : i32
    %46 = arith.extui %45 : i1 to i32
    %cst_32 = arith.constant 0xFF800000 : f32
    %cst_33 = arith.constant 0x7F800000 : f32
    %c0_i32_34 = arith.constant 0 : i32
    %47 = arith.cmpi ne, %46, %c0_i32_34 : i32
    scf.if %47 {
      %c0_35 = arith.constant 0 : index
      %c0_36 = arith.constant 0 : index
      %48 = vector.load %arg11[%c0_35, %c0_36] : memref<128x1xf32, #tpu.memory_space<vmem>>, vector<128x1xf32>
      %c0_37 = arith.constant 0 : index
      %c0_38 = arith.constant 0 : index
      %49 = vector.load %arg12[%c0_37, %c0_38] : memref<128x1xf32, #tpu.memory_space<vmem>>, vector<128x1xf32>
      %c0_39 = arith.constant 0 : index
      %c0_40 = arith.constant 0 : index
      %50 = vector.load %arg13[%c0_39, %c0_40] : memref<128x1xf32, #tpu.memory_space<vmem>>, vector<128x1xf32>
      %51 = vector.broadcast %cst_32 : f32 to vector<128x1xf32>
      %52 = arith.cmpf oeq, %48, %51 : vector<128x1xf32>
      %53 = arith.select %52, %50, %48 : vector<128x1xi1>, vector<128x1xf32>
      %54 = vector.broadcast %cst_33 : f32 to vector<128x1xf32>
      %55 = arith.cmpf oeq, %49, %54 : vector<128x1xf32>
      %56 = arith.select %55, %50, %49 : vector<128x1xi1>, vector<128x1xf32>
      %57 = arith.subf %53, %56 : vector<128x1xf32>
      %cst_41 = arith.constant 5.000000e-01 : f32
      %58 = vector.broadcast %cst_41 : f32 to vector<128x1xf32>
      %59 = arith.addf %57, %58 : vector<128x1xf32>
      %cst_42 = arith.constant 0.000000e+00 : f32
      %60 = vector.broadcast %cst_42 : f32 to vector<128x1xf32>
      %61 = arith.maximumf %59, %60 : vector<128x1xf32>
      %c0_43 = arith.constant 0 : index
      %c0_44 = arith.constant 0 : index
      %62 = vector.load %arg10[%c0_43, %c0_44] : memref<128x1xf32, #tpu.memory_space<vmem>>, vector<128x1xf32>
      tpu.vector_store %arg10[%c0_43, %c0_44], %61 {strides = array<i32>} : memref<128x1xf32, #tpu.memory_space<vmem>>, vector<128x1xf32>,
    } else {
    }
    return
  }
  func.func @transform_0(%arg0: i32, %arg1: i32) -> (i32, i32) {
    %c0_i32 = arith.constant 0 : i32
    %c0_i32_0 = arith.constant 0 : i32
    return %arg0, %c0_i32 : i32, i32
  }
  func.func @transform_1(%arg0: i32, %arg1: i32) -> (i32, i32) {
    %c0_i32 = arith.constant 0 : i32
    %c0_i32_0 = arith.constant 0 : i32
    return %c0_i32, %arg1 : i32, i32
  }
  func.func @transform_2(%arg0: i32, %arg1: i32) -> (i32, i32) {
    %c0_i32 = arith.constant 0 : i32
    %c0_i32_0 = arith.constant 0 : i32
    return %arg0, %c0_i32 : i32, i32
  }
  func.func @transform_3(%arg0: i32, %arg1: i32) -> (i32, i32) {
    %c0_i32 = arith.constant 0 : i32
    %c0_i32_0 = arith.constant 0 : i32
    return %c0_i32, %arg1 : i32, i32
  }
  func.func @transform_4(%arg0: i32, %arg1: i32) -> (i32, i32) {
    %c0_i32 = arith.constant 0 : i32
    %c0_i32_0 = arith.constant 0 : i32
    return %arg0, %c0_i32 : i32, i32
  }
  func.func @transform_5(%arg0: i32, %arg1: i32) -> (i32, i32) {
    %c0_i32 = arith.constant 0 : i32
    %c0_i32_0 = arith.constant 0 : i32
    return %c0_i32, %arg1 : i32, i32
  }
  func.func @transform_6(%arg0: i32, %arg1: i32) -> (i32, i32) {
    %c0_i32 = arith.constant 0 : i32
    %c0_i32_0 = arith.constant 0 : i32
    return %arg0, %c0_i32 : i32, i32
  }
  func.func @transform_7(%arg0: i32, %arg1: i32) -> (i32, i32) {
    %c0_i32 = arith.constant 0 : i32
    %c0_i32_0 = arith.constant 0 : i32
    return %c0_i32, %arg1 : i32, i32
  }
  func.func @transform_8(%arg0: i32, %arg1: i32) -> (i32, i32) {
    %c0_i32 = arith.constant 0 : i32
    %c0_i32_0 = arith.constant 0 : i32
    return %arg0, %c0_i32 : i32, i32
  }
}

</mosaic_0001>

<llo_original>
// kernel: triplet_loss.1
$region0: #{triplet_loss.1}
  #allocation0 [shape = 'u32[]', space=smem, size = 0x4, offset = 0x4, fixed_abs, tag = 'smem constant byte address 0x4 - core index']
  #allocation1 [shape = 'u32[144,128]{1,0:T(1,128)}', space=vmem, size = 0x12000, scoped, tag = 'internal scratch']
  #allocation2 [shape = 'f32[128,1]{1,0:T(8,128)}', space=vmem, size = 0x10000, scoped, tag = 'scratch operand']
  #allocation3 [shape = 'f32[128,1]{1,0:T(8,128)}', space=vmem, size = 0x10000, scoped, tag = 'scratch operand']
  #allocation4 [shape = 'f32[128,1]{1,0:T(8,128)}', space=vmem, size = 0x10000, scoped, tag = 'scratch operand']
  %s0 = inlined_call_operand.vmem [shape: bf16[128,128], index: 0, kind: input, shape index: {}]
  %s1 = inlined_call_operand.vmem [shape: bf16[128,128], index: 1, kind: input, shape index: {}]
  %s2 = inlined_call_operand.vmem [shape: f32[128,1], index: 2, kind: input, shape index: {}]
  %s3 = inlined_call_operand.vmem [shape: f32[1,128], index: 3, kind: input, shape index: {}]
  %s4 = inlined_call_operand.vmem [shape: s32[128,1], index: 4, kind: input, shape index: {}]
  %s5 = inlined_call_operand.vmem [shape: s32[1,128], index: 5, kind: input, shape index: {}]
  %s6 = inlined_call_operand.vmem [shape: s32[128,1], index: 6, kind: input, shape index: {}]
  %s7 = inlined_call_operand.vmem [shape: s32[1,128], index: 7, kind: input, shape index: {}]
  %s8 = inlined_call_operand.vmem [shape: f32[128,1], index: 8, kind: output, shape index: {}]
  %s9 = sld [smem:[#allocation0]]
  $region62: #{triplet_loss.1} parent=0
    _
  %s11 = ssub.s32 1, %s9
  %s12 = scalar_select 0, %s11, %s9
  // Predicated region
  $region2: #{triplet_loss.1} parent=0 // pred_check
    _
  $region3: #{triplet_loss.1} parent=0 // pred_check_branch
    %14 = sbr.rel (0) target = $region5
  $region4: #{triplet_loss.1} parent=0 // pred_region
    _
  $region5: #{triplet_loss.1} parent=0 // pred_fallthru
    _
  // Predicated region
  $region6: #{triplet_loss.1} parent=0 // pred_check
    _
  $region7: #{triplet_loss.1} parent=0 // pred_check_branch
    %16 = sbr.rel (0) target = $region9
  $region8: #{triplet_loss.1} parent=0 // pred_region
    _
  $region9: #{triplet_loss.1} parent=0 // pred_fallthru
    _
  // Predicated region
  $region10: #{triplet_loss.1} parent=0 // pred_check
    _
  $region11: #{triplet_loss.1} parent=0 // pred_check_branch
    %18 = sbr.rel (0) target = $region13
  $region12: #{triplet_loss.1} parent=0 // pred_region
    _
  $region13: #{triplet_loss.1} parent=0 // pred_fallthru
    _
  // Predicated region
  $region14: #{triplet_loss.1} parent=0 // pred_check
    _
  $region15: #{triplet_loss.1} parent=0 // pred_check_branch
    %20 = sbr.rel (0) target = $region17
  $region16: #{triplet_loss.1} parent=0 // pred_region
    _
  $region17: #{triplet_loss.1} parent=0 // pred_fallthru
    _
  // Predicated region
  $region18: #{triplet_loss.1} parent=0 // pred_check
    _
  $region19: #{triplet_loss.1} parent=0 // pred_check_branch
    %22 = sbr.rel (0) target = $region21
  $region20: #{triplet_loss.1} parent=0 // pred_region
    _
  $region21: #{triplet_loss.1} parent=0 // pred_fallthru
    _
  // Predicated region
  $region22: #{triplet_loss.1} parent=0 // pred_check
    _
  $region23: #{triplet_loss.1} parent=0 // pred_check_branch
    %24 = sbr.rel (0) target = $region25
  $region24: #{triplet_loss.1} parent=0 // pred_region
    _
  $region25: #{triplet_loss.1} parent=0 // pred_fallthru
    _
  // Predicated region
  $region26: #{triplet_loss.1} parent=0 // pred_check
    _
  $region27: #{triplet_loss.1} parent=0 // pred_check_branch
    %26 = sbr.rel (0) target = $region29
  $region28: #{triplet_loss.1} parent=0 // pred_region
    _
  $region29: #{triplet_loss.1} parent=0 // pred_fallthru
    _
  // Predicated region
  $region30: #{triplet_loss.1} parent=0 // pred_check
    _
  $region31: #{triplet_loss.1} parent=0 // pred_check_branch
    %28 = sbr.rel (0) target = $region33
  $region32: #{triplet_loss.1} parent=0 // pred_region
    _
  $region33: #{triplet_loss.1} parent=0 // pred_fallthru
    _
  %p30 = scmp.eq.s32.totalorder 0, 0
  // Predicated region
  $region34: #{triplet_loss.1} parent=0 // pred_check
    %p31 = pneg %p30
  $region35: #{triplet_loss.1} parent=0 // pred_check_branch
    %33 = sbr.rel (%p31) target = $region37
  $region36: #{triplet_loss.1} parent=0 // pred_region
    %vm34 = vcmask 7168
    %35 = vst.msk [vmem:[#allocation2] sm:$0xff] %vm34, -inf
    %36 = vst.msk [vmem:[#allocation2 + $0x8] sm:$0xff] %vm34, -inf
    %37 = vst.msk [vmem:[#allocation2 + $0x10] sm:$0xff] %vm34, -inf
    %38 = vst.msk [vmem:[#allocation2 + $0x18] sm:$0xff] %vm34, -inf
    %39 = vst.msk [vmem:[#allocation2 + $0x20] sm:$0xff] %vm34, -inf
    %40 = vst.msk [vmem:[#allocation2 + $0x28] sm:$0xff] %vm34, -inf
    %41 = vst.msk [vmem:[#allocation2 + $0x30] sm:$0xff] %vm34, -inf
    %42 = vst.msk [vmem:[#allocation2 + $0x38] sm:$0xff] %vm34, -inf
    %43 = vst.msk [vmem:[#allocation2 + $0x40] sm:$0xff] %vm34, -inf
    %44 = vst.msk [vmem:[#allocation2 + $0x48] sm:$0xff] %vm34, -inf
    %45 = vst.msk [vmem:[#allocation2 + $0x50] sm:$0xff] %vm34, -inf
    %46 = vst.msk [vmem:[#allocation2 + $0x58] sm:$0xff] %vm34, -inf
    %47 = vst.msk [vmem:[#allocation2 + $0x60] sm:$0xff] %vm34, -inf
    %48 = vst.msk [vmem:[#allocation2 + $0x68] sm:$0xff] %vm34, -inf
    %49 = vst.msk [vmem:[#allocation2 + $0x70] sm:$0xff] %vm34, -inf
    %50 = vst.msk [vmem:[#allocation2 + $0x78] sm:$0xff] %vm34, -inf
    %51 = vst.msk [vmem:[#allocation3] sm:$0xff] %vm34, inf
    %52 = vst.msk [vmem:[#allocation3 + $0x8] sm:$0xff] %vm34, inf
    %53 = vst.msk [vmem:[#allocation3 + $0x10] sm:$0xff] %vm34, inf
    %54 = vst.msk [vmem:[#allocation3 + $0x18] sm:$0xff] %vm34, inf
    %55 = vst.msk [vmem:[#allocation3 + $0x20] sm:$0xff] %vm34, inf
    %56 = vst.msk [vmem:[#allocation3 + $0x28] sm:$0xff] %vm34, inf
    %57 = vst.msk [vmem:[#allocation3 + $0x30] sm:$0xff] %vm34, inf
    %58 = vst.msk [vmem:[#allocation3 + $0x38] sm:$0xff] %vm34, inf
    %59 = vst.msk [vmem:[#allocation3 + $0x40] sm:$0xff] %vm34, inf
    %60 = vst.msk [vmem:[#allocation3 + $0x48] sm:$0xff] %vm34, inf
    %61 = vst.msk [vmem:[#allocation3 + $0x50] sm:$0xff] %vm34, inf
    %62 = vst.msk [vmem:[#allocation3 + $0x58] sm:$0xff] %vm34, inf
    %63 = vst.msk [vmem:[#allocation3 + $0x60] sm:$0xff] %vm34, inf
    %64 = vst.msk [vmem:[#allocation3 + $0x68] sm:$0xff] %vm34, inf
    %65 = vst.msk [vmem:[#allocation3 + $0x70] sm:$0xff] %vm34, inf
    %66 = vst.msk [vmem:[#allocation3 + $0x78] sm:$0xff] %vm34, inf
  $region37: #{triplet_loss.1} parent=0 // pred_fallthru
    _
  %v67 = vld [vmem:[%s0] sm:$0xf]
  %v68 = vld [vmem:[%s0 + $0x4] sm:$0xf]
  %v69 = vld [vmem:[%s0 + $0x8] sm:$0xf]
  %v70 = vld [vmem:[%s0 + $0xc] sm:$0xf]
  %v71 = vld [vmem:[%s0 + $0x10] sm:$0xf]
  %v72 = vld [vmem:[%s0 + $0x14] sm:$0xf]
  %v73 = vld [vmem:[%s0 + $0x18] sm:$0xf]
  %v74 = vld [vmem:[%s0 + $0x1c] sm:$0xf]
  %v75 = vld [vmem:[%s0 + $0x20] sm:$0xf]
  %v76 = vld [vmem:[%s0 + $0x24] sm:$0xf]
  %v77 = vld [vmem:[%s0 + $0x28] sm:$0xf]
  %v78 = vld [vmem:[%s0 + $0x2c] sm:$0xf]
  %v79 = vld [vmem:[%s0 + $0x30] sm:$0xf]
  %v80 = vld [vmem:[%s0 + $0x34] sm:$0xf]
  %v81 = vld [vmem:[%s0 + $0x38] sm:$0xf]
  %v82 = vld [vmem:[%s0 + $0x3c] sm:$0xf]
  %v83 = vld [vmem:[%s1] sm:$0xf]
  %v84 = vld [vmem:[%s1 + $0x4] sm:$0xf]
  %v85 = vld [vmem:[%s1 + $0x8] sm:$0xf]
  %v86 = vld [vmem:[%s1 + $0xc] sm:$0xf]
  %v87 = vld [vmem:[%s1 + $0x10] sm:$0xf]
  %v88 = vld [vmem:[%s1 + $0x14] sm:$0xf]
  %v89 = vld [vmem:[%s1 + $0x18] sm:$0xf]
  %v90 = vld [vmem:[%s1 + $0x1c] sm:$0xf]
  %v91 = vld [vmem:[%s1 + $0x20] sm:$0xf]
  %v92 = vld [vmem:[%s1 + $0x24] sm:$0xf]
  %v93 = vld [vmem:[%s1 + $0x28] sm:$0xf]
  %v94 = vld [vmem:[%s1 + $0x2c] sm:$0xf]
  %v95 = vld [vmem:[%s1 + $0x30] sm:$0xf]
  %v96 = vld [vmem:[%s1 + $0x34] sm:$0xf]
  %v97 = vld [vmem:[%s1 + $0x38] sm:$0xf]
  %v98 = vld [vmem:[%s1 + $0x3c] sm:$0xf]
  %v115 = vunpack.c.l.b16 %v67
  %v116 = vunpack.c.l.b16 %v68
  %v117 = vunpack.c.l.b16 %v69
  %v118 = vunpack.c.l.b16 %v70
  %v119 = vunpack.c.l.b16 %v71
  %v120 = vunpack.c.l.b16 %v72
  %v121 = vunpack.c.l.b16 %v73
  %v122 = vunpack.c.l.b16 %v74
  %v123 = vunpack.c.l.b16 %v75
  %v124 = vunpack.c.l.b16 %v76
  %v125 = vunpack.c.l.b16 %v77
  %v126 = vunpack.c.l.b16 %v78
  %v127 = vunpack.c.l.b16 %v79
  %v128 = vunpack.c.l.b16 %v80
  %v129 = vunpack.c.l.b16 %v81
  %v130 = vunpack.c.l.b16 %v82
  %v131 = vpack.c.b16 %v116, %v115
  %v132 = vpack.c.b16 %v118, %v117
  %v133 = vpack.c.b16 %v120, %v119
  %v134 = vpack.c.b16 %v122, %v121
  %v135 = vpack.c.b16 %v124, %v123
  %v136 = vpack.c.b16 %v126, %v125
  %v137 = vpack.c.b16 %v128, %v127
  %v138 = vpack.c.b16 %v130, %v129
  %v163 = vunpack.c.l.b16 %v83
  %v164 = vunpack.c.l.b16 %v84
  %v165 = vunpack.c.l.b16 %v85
  %v166 = vunpack.c.l.b16 %v86
  %v167 = vunpack.c.l.b16 %v87
  %v168 = vunpack.c.l.b16 %v88
  %v169 = vunpack.c.l.b16 %v89
  %v170 = vunpack.c.l.b16 %v90
  %v171 = vunpack.c.l.b16 %v91
  %v172 = vunpack.c.l.b16 %v92
  %v173 = vunpack.c.l.b16 %v93
  %v174 = vunpack.c.l.b16 %v94
  %v175 = vunpack.c.l.b16 %v95
  %v176 = vunpack.c.l.b16 %v96
  %v177 = vunpack.c.l.b16 %v97
  %v178 = vunpack.c.l.b16 %v98
  %v179 = vpack.c.b16 %v164, %v163
  %v180 = vpack.c.b16 %v166, %v165
  %v181 = vpack.c.b16 %v168, %v167
  %v182 = vpack.c.b16 %v170, %v169
  %v183 = vpack.c.b16 %v172, %v171
  %v184 = vpack.c.b16 %v174, %v173
  %v185 = vpack.c.b16 %v176, %v175
  %v186 = vpack.c.b16 %v178, %v177
  %195 = vmatprep.subr.bf16.mxu0 0
  %196 = vmatpush1.bf16.msra.mxu0 %v179
  %197 = vmatprep.subr.bf16.mxu0 0
  %198 = vmatpush1.bf16.msra.mxu0 %v180
  %199 = vmatprep.subr.bf16.mxu0 0
  %200 = vmatpush1.bf16.msra.mxu0 %v181
  %201 = vmatprep.subr.bf16.mxu0 0
  %202 = vmatpush1.bf16.msra.mxu0 %v182
  %203 = vmatprep.subr.bf16.mxu0 0
  %204 = vmatpush1.bf16.msra.mxu0 %v183
  %205 = vmatprep.subr.bf16.mxu0 0
  %206 = vmatpush1.bf16.msra.mxu0 %v184
  %207 = vmatprep.subr.bf16.mxu0 0
  %208 = vmatpush1.bf16.msra.mxu0 %v185
  %209 = vmatprep.subr.bf16.mxu0 0
  %210 = vmatpush1.bf16.msra.mxu0 %v186
  %211 = vmatprep.subr.bf16.mxu0 0
  %212 = vmatpush1.bf16.msra.mxu0 0
  %213 = vmatprep.subr.bf16.mxu0 0
  %214 = vmatpush1.bf16.msra.mxu0 0
  %215 = vmatprep.subr.bf16.mxu0 0
  %216 = vmatpush1.bf16.msra.mxu0 0
  %217 = vmatprep.subr.bf16.mxu0 0
  %218 = vmatpush1.bf16.msra.mxu0 0
  %219 = vmatprep.subr.bf16.mxu0 0
  %220 = vmatpush1.bf16.msra.mxu0 0
  %221 = vmatprep.subr.bf16.mxu0 0
  %222 = vmatpush1.bf16.msra.mxu0 0
  %223 = vmatprep.subr.bf16.mxu0 0
  %224 = vmatpush1.bf16.msra.mxu0 0
  %225 = vmatprep.subr.bf16.mxu0 0
  %226 = vmatpush1.bf16.msra.mxu0 0
  %227 = vmatprep.mubr.bf16.mxu0 0
  %228 = vmatmul.mubr.bf16.gmra.mrb[0].mxu0 %v131
  %v229 = vpop.f32.mrb[0].mxu0
  %v230 = vadd.f32 0.0, %v229
  %v231 = vpop.f32.mrb[0].mxu0
  %v232 = vpop.f32.mrb[0].mxu0
  %v233 = vadd.f32 0.0, %v232
  %v234 = vpop.f32.mrb[0].mxu0
  %235 = vmatprep.mubr.bf16.mxu0 0
  %236 = vmatmul.mubr.bf16.gmra.mrb[0].mxu0 %v132
  %v237 = vpop.f32.mrb[0].mxu0
  %v238 = vadd.f32 0.0, %v237
  %v239 = vpop.f32.mrb[0].mxu0
  %v240 = vpop.f32.mrb[0].mxu0
  %v241 = vadd.f32 0.0, %v240
  %v242 = vpop.f32.mrb[0].mxu0
  %243 = vmatprep.mubr.bf16.mxu0 0
  %244 = vmatmul.mubr.bf16.gmra.mrb[0].mxu0 %v133
  %v245 = vpop.f32.mrb[0].mxu0
  %v246 = vadd.f32 0.0, %v245
  %v247 = vpop.f32.mrb[0].mxu0
  %v248 = vpop.f32.mrb[0].mxu0
  %v249 = vadd.f32 0.0, %v248
  %v250 = vpop.f32.mrb[0].mxu0
  %251 = vmatprep.mubr.bf16.mxu0 0
  %252 = vmatmul.mubr.bf16.gmra.mrb[0].mxu0 %v134
  %v253 = vpop.f32.mrb[0].mxu0
  %v254 = vadd.f32 0.0, %v253
  %v255 = vpop.f32.mrb[0].mxu0
  %v256 = vpop.f32.mrb[0].mxu0
  %v257 = vadd.f32 0.0, %v256
  %v258 = vpop.f32.mrb[0].mxu0
  %259 = vmatprep.mubr.bf16.mxu0 0
  %260 = vmatmul.mubr.bf16.gmra.mrb[0].mxu0 %v135
  %v261 = vpop.f32.mrb[0].mxu0
  %v262 = vadd.f32 0.0, %v261
  %v263 = vpop.f32.mrb[0].mxu0
  %v264 = vpop.f32.mrb[0].mxu0
  %v265 = vadd.f32 0.0, %v264
  %v266 = vpop.f32.mrb[0].mxu0
  %267 = vmatprep.mubr.bf16.mxu0 0
  %268 = vmatmul.mubr.bf16.gmra.mrb[0].mxu0 %v136
  %v269 = vpop.f32.mrb[0].mxu0
  %v270 = vadd.f32 0.0, %v269
  %v271 = vpop.f32.mrb[0].mxu0
  %v272 = vpop.f32.mrb[0].mxu0
  %v273 = vadd.f32 0.0, %v272
  %v274 = vpop.f32.mrb[0].mxu0
  %275 = vmatprep.mubr.bf16.mxu0 0
  %276 = vmatmul.mubr.bf16.gmra.mrb[0].mxu0 %v137
  %v277 = vpop.f32.mrb[0].mxu0
  %v278 = vadd.f32 0.0, %v277
  %v279 = vpop.f32.mrb[0].mxu0
  %v280 = vpop.f32.mrb[0].mxu0
  %v281 = vadd.f32 0.0, %v280
  %v282 = vpop.f32.mrb[0].mxu0
  %283 = vmatprep.mubr.bf16.mxu0 0
  %284 = vmatmul.mubr.bf16.gmra.mrb[0].mxu0 %v138
  %v285 = vpop.f32.mrb[0].mxu0
  %v286 = vadd.f32 0.0, %v285
  %v287 = vpop.f32.mrb[0].mxu0
  %v288 = vpop.f32.mrb[0].mxu0
  %v289 = vadd.f32 0.0, %v288
  %v290 = vpop.f32.mrb[0].mxu0
  %291 = vdwg.mxu0
  %v292 = vld [vmem:[%s2] sm:$0xff]
  %v293 = vld [vmem:[%s2 + $0x8] sm:$0xff]
  %v294 = vld [vmem:[%s2 + $0x10] sm:$0xff]
  %v295 = vld [vmem:[%s2 + $0x18] sm:$0xff]
  %v296 = vld [vmem:[%s2 + $0x20] sm:$0xff]
  %v297 = vld [vmem:[%s2 + $0x28] sm:$0xff]
  %v298 = vld [vmem:[%s2 + $0x30] sm:$0xff]
  %v299 = vld [vmem:[%s2 + $0x38] sm:$0xff]
  %v300 = vld [vmem:[%s2 + $0x40] sm:$0xff]
  %v301 = vld [vmem:[%s2 + $0x48] sm:$0xff]
  %v302 = vld [vmem:[%s2 + $0x50] sm:$0xff]
  %v303 = vld [vmem:[%s2 + $0x58] sm:$0xff]
  %v304 = vld [vmem:[%s2 + $0x60] sm:$0xff]
  %v305 = vld [vmem:[%s2 + $0x68] sm:$0xff]
  %v306 = vld [vmem:[%s2 + $0x70] sm:$0xff]
  %v307 = vld [vmem:[%s2 + $0x78] sm:$0xff]
  %v308 = vld [vmem:[%s3] sm:$0x1]
  %310 = vset.pattern.permute.xlu0 0
  %311 = vperm.xlu0 %310, %v292
  %v312 = vpop.permute.xlu0 %311
  %315 = vset.pattern.permute.xlu0 0
  %316 = vperm.xlu0 %315, %v293
  %v317 = vpop.permute.xlu0 %316
  %320 = vset.pattern.permute.xlu0 0
  %321 = vperm.xlu0 %320, %v294
  %v322 = vpop.permute.xlu0 %321
  %325 = vset.pattern.permute.xlu0 0
  %326 = vperm.xlu0 %325, %v295
  %v327 = vpop.permute.xlu0 %326
  %330 = vset.pattern.permute.xlu0 0
  %331 = vperm.xlu0 %330, %v296
  %v332 = vpop.permute.xlu0 %331
  %335 = vset.pattern.permute.xlu0 0
  %336 = vperm.xlu0 %335, %v297
  %v337 = vpop.permute.xlu0 %336
  %340 = vset.pattern.permute.xlu0 0
  %341 = vperm.xlu0 %340, %v298
  %v342 = vpop.permute.xlu0 %341
  %345 = vset.pattern.permute.xlu0 0
  %346 = vperm.xlu0 %345, %v299
  %v347 = vpop.permute.xlu0 %346
  %350 = vset.pattern.permute.xlu0 0
  %351 = vperm.xlu0 %350, %v300
  %v352 = vpop.permute.xlu0 %351
  %355 = vset.pattern.permute.xlu0 0
  %356 = vperm.xlu0 %355, %v301
  %v357 = vpop.permute.xlu0 %356
  %360 = vset.pattern.permute.xlu0 0
  %361 = vperm.xlu0 %360, %v302
  %v362 = vpop.permute.xlu0 %361
  %365 = vset.pattern.permute.xlu0 0
  %366 = vperm.xlu0 %365, %v303
  %v367 = vpop.permute.xlu0 %366
  %370 = vset.pattern.permute.xlu0 0
  %371 = vperm.xlu0 %370, %v304
  %v372 = vpop.permute.xlu0 %371
  %375 = vset.pattern.permute.xlu0 0
  %376 = vperm.xlu0 %375, %v305
  %v377 = vpop.permute.xlu0 %376
  %380 = vset.pattern.permute.xlu0 0
  %381 = vperm.xlu0 %380, %v306
  %v382 = vpop.permute.xlu0 %381
  %385 = vset.pattern.permute.xlu0 0
  %386 = vperm.xlu0 %385, %v307
  %v387 = vpop.permute.xlu0 %386
  %v390 = vlaneseq
  %v391 = vshrl.u32 %v390, 7
  %v392 = vsub.s32 0, %v391
  %v393 = vrot.slane %v308, %v392
  %v395 = vadd.f32 %v312, %v393
  %v396 = vadd.f32 %v317, %v393
  %v397 = vadd.f32 %v322, %v393
  %v398 = vadd.f32 %v327, %v393
  %v399 = vadd.f32 %v332, %v393
  %v400 = vadd.f32 %v337, %v393
  %v401 = vadd.f32 %v342, %v393
  %v402 = vadd.f32 %v347, %v393
  %v403 = vadd.f32 %v352, %v393
  %v404 = vadd.f32 %v357, %v393
  %v405 = vadd.f32 %v362, %v393
  %v406 = vadd.f32 %v367, %v393
  %v407 = vadd.f32 %v372, %v393
  %v408 = vadd.f32 %v377, %v393
  %v409 = vadd.f32 %v382, %v393
  %v410 = vadd.f32 %v387, %v393
  %v411 = vmul.f32 %v230, 2.0
  %v412 = vmul.f32 %v233, 2.0
  %v413 = vmul.f32 %v238, 2.0
  %v414 = vmul.f32 %v241, 2.0
  %v415 = vmul.f32 %v246, 2.0
  %v416 = vmul.f32 %v249, 2.0
  %v417 = vmul.f32 %v254, 2.0
  %v418 = vmul.f32 %v257, 2.0
  %v419 = vmul.f32 %v262, 2.0
  %v420 = vmul.f32 %v265, 2.0
  %v421 = vmul.f32 %v270, 2.0
  %v422 = vmul.f32 %v273, 2.0
  %v423 = vmul.f32 %v278, 2.0
  %v424 = vmul.f32 %v281, 2.0
  %v425 = vmul.f32 %v286, 2.0
  %v426 = vmul.f32 %v289, 2.0
  %v427 = vsub.f32 %v395, %v411
  %v428 = vsub.f32 %v396, %v412
  %v429 = vsub.f32 %v397, %v413
  %v430 = vsub.f32 %v398, %v414
  %v431 = vsub.f32 %v399, %v415
  %v432 = vsub.f32 %v400, %v416
  %v433 = vsub.f32 %v401, %v417
  %v434 = vsub.f32 %v402, %v418
  %v435 = vsub.f32 %v403, %v419
  %v436 = vsub.f32 %v404, %v420
  %v437 = vsub.f32 %v405, %v421
  %v438 = vsub.f32 %v406, %v422
  %v439 = vsub.f32 %v407, %v423
  %v440 = vsub.f32 %v408, %v424
  %v441 = vsub.f32 %v409, %v425
  %v442 = vsub.f32 %v410, %v426
  %v443 = vmax.f32 %v427, 0.0
  %v444 = vmax.f32 %v428, 0.0
  %v445 = vmax.f32 %v429, 0.0
  %v446 = vmax.f32 %v430, 0.0
  %v447 = vmax.f32 %v431, 0.0
  %v448 = vmax.f32 %v432, 0.0
  %v449 = vmax.f32 %v433, 0.0
  %v450 = vmax.f32 %v434, 0.0
  %v451 = vmax.f32 %v435, 0.0
  %v452 = vmax.f32 %v436, 0.0
  %v453 = vmax.f32 %v437, 0.0
  %v454 = vmax.f32 %v438, 0.0
  %v455 = vmax.f32 %v439, 0.0
  %v456 = vmax.f32 %v440, 0.0
  %v457 = vmax.f32 %v441, 0.0
  %v458 = vmax.f32 %v442, 0.0
  // Predicated region
  $region38: #{triplet_loss.1} parent=0 // pred_check
    %p459 = pneg %p30
  $region39: #{triplet_loss.1} parent=0 // pred_check_branch
    %461 = sbr.rel (%p459) target = $region41
  $region40: #{triplet_loss.1} parent=0 // pred_region
    %vm462 = vcmask 7168
    %463 = vst.msk [vmem:[#allocation4] sm:$0xff] %vm462, %v443
    %464 = vst.msk [vmem:[#allocation4 + $0x8] sm:$0xff] %vm462, %v444
    %465 = vst.msk [vmem:[#allocation4 + $0x10] sm:$0xff] %vm462, %v445
    %466 = vst.msk [vmem:[#allocation4 + $0x18] sm:$0xff] %vm462, %v446
    %467 = vst.msk [vmem:[#allocation4 + $0x20] sm:$0xff] %vm462, %v447
    %468 = vst.msk [vmem:[#allocation4 + $0x28] sm:$0xff] %vm462, %v448
    %469 = vst.msk [vmem:[#allocation4 + $0x30] sm:$0xff] %vm462, %v449
    %470 = vst.msk [vmem:[#allocation4 + $0x38] sm:$0xff] %vm462, %v450
    %471 = vst.msk [vmem:[#allocation4 + $0x40] sm:$0xff] %vm462, %v451
    %472 = vst.msk [vmem:[#allocation4 + $0x48] sm:$0xff] %vm462, %v452
    %473 = vst.msk [vmem:[#allocation4 + $0x50] sm:$0xff] %vm462, %v453
    %474 = vst.msk [vmem:[#allocation4 + $0x58] sm:$0xff] %vm462, %v454
    %475 = vst.msk [vmem:[#allocation4 + $0x60] sm:$0xff] %vm462, %v455
    %476 = vst.msk [vmem:[#allocation4 + $0x68] sm:$0xff] %vm462, %v456
    %477 = vst.msk [vmem:[#allocation4 + $0x70] sm:$0xff] %vm462, %v457
    %478 = vst.msk [vmem:[#allocation4 + $0x78] sm:$0xff] %vm462, %v458
  $region41: #{triplet_loss.1} parent=0 // pred_fallthru
    _
  %v479 = vld [vmem:[%s4] sm:$0xff]
  %v480 = vld [vmem:[%s4 + $0x8] sm:$0xff]
  %v481 = vld [vmem:[%s4 + $0x10] sm:$0xff]
  %v482 = vld [vmem:[%s4 + $0x18] sm:$0xff]
  %v483 = vld [vmem:[%s4 + $0x20] sm:$0xff]
  %v484 = vld [vmem:[%s4 + $0x28] sm:$0xff]
  %v485 = vld [vmem:[%s4 + $0x30] sm:$0xff]
  %v486 = vld [vmem:[%s4 + $0x38] sm:$0xff]
  %v487 = vld [vmem:[%s4 + $0x40] sm:$0xff]
  %v488 = vld [vmem:[%s4 + $0x48] sm:$0xff]
  %v489 = vld [vmem:[%s4 + $0x50] sm:$0xff]
  %v490 = vld [vmem:[%s4 + $0x58] sm:$0xff]
  %v491 = vld [vmem:[%s4 + $0x60] sm:$0xff]
  %v492 = vld [vmem:[%s4 + $0x68] sm:$0xff]
  %v493 = vld [vmem:[%s4 + $0x70] sm:$0xff]
  %v494 = vld [vmem:[%s4 + $0x78] sm:$0xff]
  %v495 = vld [vmem:[%s5] sm:$0x1]
  %496 = vset.pattern.permute.xlu0 0
  %497 = vperm.xlu0 %496, %v479
  %v498 = vpop.permute.xlu0 %497
  %499 = vset.pattern.permute.xlu0 0
  %500 = vperm.xlu0 %499, %v480
  %v501 = vpop.permute.xlu0 %500
  %502 = vset.pattern.permute.xlu0 0
  %503 = vperm.xlu0 %502, %v481
  %v504 = vpop.permute.xlu0 %503
  %505 = vset.pattern.permute.xlu0 0
  %506 = vperm.xlu0 %505, %v482
  %v507 = vpop.permute.xlu0 %506
  %508 = vset.pattern.permute.xlu0 0
  %509 = vperm.xlu0 %508, %v483
  %v510 = vpop.permute.xlu0 %509
  %511 = vset.pattern.permute.xlu0 0
  %512 = vperm.xlu0 %511, %v484
  %v513 = vpop.permute.xlu0 %512
  %514 = vset.pattern.permute.xlu0 0
  %515 = vperm.xlu0 %514, %v485
  %v516 = vpop.permute.xlu0 %515
  %517 = vset.pattern.permute.xlu0 0
  %518 = vperm.xlu0 %517, %v486
  %v519 = vpop.permute.xlu0 %518
  %520 = vset.pattern.permute.xlu0 0
  %521 = vperm.xlu0 %520, %v487
  %v522 = vpop.permute.xlu0 %521
  %523 = vset.pattern.permute.xlu0 0
  %524 = vperm.xlu0 %523, %v488
  %v525 = vpop.permute.xlu0 %524
  %526 = vset.pattern.permute.xlu0 0
  %527 = vperm.xlu0 %526, %v489
  %v528 = vpop.permute.xlu0 %527
  %529 = vset.pattern.permute.xlu0 0
  %530 = vperm.xlu0 %529, %v490
  %v531 = vpop.permute.xlu0 %530
  %532 = vset.pattern.permute.xlu0 0
  %533 = vperm.xlu0 %532, %v491
  %v534 = vpop.permute.xlu0 %533
  %535 = vset.pattern.permute.xlu0 0
  %536 = vperm.xlu0 %535, %v492
  %v537 = vpop.permute.xlu0 %536
  %538 = vset.pattern.permute.xlu0 0
  %539 = vperm.xlu0 %538, %v493
  %v540 = vpop.permute.xlu0 %539
  %541 = vset.pattern.permute.xlu0 0
  %542 = vperm.xlu0 %541, %v494
  %v543 = vpop.permute.xlu0 %542
  %v544 = vlaneseq
  %v545 = vshrl.u32 %v544, 7
  %v546 = vsub.s32 0, %v545
  %v547 = vrot.slane %v495, %v546
  %vm548 = vcmp.eq.s32.totalorder %v498, %v547
  %vm549 = vcmp.eq.s32.totalorder %v501, %v547
  %vm550 = vcmp.eq.s32.totalorder %v504, %v547
  %vm551 = vcmp.eq.s32.totalorder %v507, %v547
  %vm552 = vcmp.eq.s32.totalorder %v510, %v547
  %vm553 = vcmp.eq.s32.totalorder %v513, %v547
  %vm554 = vcmp.eq.s32.totalorder %v516, %v547
  %vm555 = vcmp.eq.s32.totalorder %v519, %v547
  %vm556 = vcmp.eq.s32.totalorder %v522, %v547
  %vm557 = vcmp.eq.s32.totalorder %v525, %v547
  %vm558 = vcmp.eq.s32.totalorder %v528, %v547
  %vm559 = vcmp.eq.s32.totalorder %v531, %v547
  %vm560 = vcmp.eq.s32.totalorder %v534, %v547
  %vm561 = vcmp.eq.s32.totalorder %v537, %v547
  %vm562 = vcmp.eq.s32.totalorder %v540, %v547
  %vm563 = vcmp.eq.s32.totalorder %v543, %v547
  %v564 = vsel %vm548, %v443, -inf
  %v565 = vsel %vm549, %v444, -inf
  %v566 = vsel %vm550, %v445, -inf
  %v567 = vsel %vm551, %v446, -inf
  %v568 = vsel %vm552, %v447, -inf
  %v569 = vsel %vm553, %v448, -inf
  %v570 = vsel %vm554, %v449, -inf
  %v571 = vsel %vm555, %v450, -inf
  %v572 = vsel %vm556, %v451, -inf
  %v573 = vsel %vm557, %v452, -inf
  %v574 = vsel %vm558, %v453, -inf
  %v575 = vsel %vm559, %v454, -inf
  %v576 = vsel %vm560, %v455, -inf
  %v577 = vsel %vm561, %v456, -inf
  %v578 = vsel %vm562, %v457, -inf
  %v579 = vsel %vm563, %v458, -inf
  %s580 = smul.u32 0, 128
  %s581 = smul.u32 0, 128
  %s582 = sadd.s32 %s581, 128
  %p583 = scmp.lt.s32.totalorder %s580, %s582
  %s584 = sadd.s32 %s580, 128
  %p585 = scmp.lt.s32.totalorder %s581, %s584
  %p586 = pnand %p583, %p585
  %p587 = pneg %p586
  // Predicated region
  $region42: #{triplet_loss.1} parent=0 // pred_check
    _
  $region43: #{triplet_loss.1} parent=0 // pred_check_branch
    %589 = sbr.rel (%p586) target = $region45
  $region44: #{triplet_loss.1} parent=0 // pred_region
    %v590 = vld [vmem:[%s6] sm:$0xff]
    %v591 = vld [vmem:[%s6 + $0x8] sm:$0xff]
    %v592 = vld [vmem:[%s6 + $0x10] sm:$0xff]
    %v593 = vld [vmem:[%s6 + $0x18] sm:$0xff]
    %v594 = vld [vmem:[%s6 + $0x20] sm:$0xff]
    %v595 = vld [vmem:[%s6 + $0x28] sm:$0xff]
    %v596 = vld [vmem:[%s6 + $0x30] sm:$0xff]
    %v597 = vld [vmem:[%s6 + $0x38] sm:$0xff]
    %v598 = vld [vmem:[%s6 + $0x40] sm:$0xff]
    %v599 = vld [vmem:[%s6 + $0x48] sm:$0xff]
    %v600 = vld [vmem:[%s6 + $0x50] sm:$0xff]
    %v601 = vld [vmem:[%s6 + $0x58] sm:$0xff]
    %v602 = vld [vmem:[%s6 + $0x60] sm:$0xff]
    %v603 = vld [vmem:[%s6 + $0x68] sm:$0xff]
    %v604 = vld [vmem:[%s6 + $0x70] sm:$0xff]
    %v605 = vld [vmem:[%s6 + $0x78] sm:$0xff]
    %v606 = vld [vmem:[%s7] sm:$0x1]
    %607 = vset.pattern.permute.xlu0 0
    %608 = vperm.xlu0 %607, %v590
    %v609 = vpop.permute.xlu0 %608
    %610 = vset.pattern.permute.xlu0 0
    %611 = vperm.xlu0 %610, %v591
    %v612 = vpop.permute.xlu0 %611
    %613 = vset.pattern.permute.xlu0 0
    %614 = vperm.xlu0 %613, %v592
    %v615 = vpop.permute.xlu0 %614
    %616 = vset.pattern.permute.xlu0 0
    %617 = vperm.xlu0 %616, %v593
    %v618 = vpop.permute.xlu0 %617
    %619 = vset.pattern.permute.xlu0 0
    %620 = vperm.xlu0 %619, %v594
    %v621 = vpop.permute.xlu0 %620
    %622 = vset.pattern.permute.xlu0 0
    %623 = vperm.xlu0 %622, %v595
    %v624 = vpop.permute.xlu0 %623
    %625 = vset.pattern.permute.xlu0 0
    %626 = vperm.xlu0 %625, %v596
    %v627 = vpop.permute.xlu0 %626
    %628 = vset.pattern.permute.xlu0 0
    %629 = vperm.xlu0 %628, %v597
    %v630 = vpop.permute.xlu0 %629
    %631 = vset.pattern.permute.xlu0 0
    %632 = vperm.xlu0 %631, %v598
    %v633 = vpop.permute.xlu0 %632
    %634 = vset.pattern.permute.xlu0 0
    %635 = vperm.xlu0 %634, %v599
    %v636 = vpop.permute.xlu0 %635
    %637 = vset.pattern.permute.xlu0 0
    %638 = vperm.xlu0 %637, %v600
    %v639 = vpop.permute.xlu0 %638
    %640 = vset.pattern.permute.xlu0 0
    %641 = vperm.xlu0 %640, %v601
    %v642 = vpop.permute.xlu0 %641
    %643 = vset.pattern.permute.xlu0 0
    %644 = vperm.xlu0 %643, %v602
    %v645 = vpop.permute.xlu0 %644
    %646 = vset.pattern.permute.xlu0 0
    %647 = vperm.xlu0 %646, %v603
    %v648 = vpop.permute.xlu0 %647
    %649 = vset.pattern.permute.xlu0 0
    %650 = vperm.xlu0 %649, %v604
    %v651 = vpop.permute.xlu0 %650
    %652 = vset.pattern.permute.xlu0 0
    %653 = vperm.xlu0 %652, %v605
    %v654 = vpop.permute.xlu0 %653
    %v655 = vlaneseq
    %v656 = vshrl.u32 %v655, 7
    %v657 = vsub.s32 0, %v656
    %v658 = vrot.slane %v606, %v657
    %vm659 = vcmp.ne.s32.totalorder %v609, %v658
    %vm660 = vcmp.ne.s32.totalorder %v612, %v658
    %vm661 = vcmp.ne.s32.totalorder %v615, %v658
    %vm662 = vcmp.ne.s32.totalorder %v618, %v658
    %vm663 = vcmp.ne.s32.totalorder %v621, %v658
    %vm664 = vcmp.ne.s32.totalorder %v624, %v658
    %vm665 = vcmp.ne.s32.totalorder %v627, %v658
    %vm666 = vcmp.ne.s32.totalorder %v630, %v658
    %vm667 = vcmp.ne.s32.totalorder %v633, %v658
    %vm668 = vcmp.ne.s32.totalorder %v636, %v658
    %vm669 = vcmp.ne.s32.totalorder %v639, %v658
    %vm670 = vcmp.ne.s32.totalorder %v642, %v658
    %vm671 = vcmp.ne.s32.totalorder %v645, %v658
    %vm672 = vcmp.ne.s32.totalorder %v648, %v658
    %vm673 = vcmp.ne.s32.totalorder %v651, %v658
    %vm674 = vcmp.ne.s32.totalorder %v654, %v658
    %v675 = vsel %vm659, %v564, -inf
    %v676 = vsel %vm660, %v565, -inf
    %v677 = vsel %vm661, %v566, -inf
    %v678 = vsel %vm662, %v567, -inf
    %v679 = vsel %vm663, %v568, -inf
    %v680 = vsel %vm664, %v569, -inf
    %v681 = vsel %vm665, %v570, -inf
    %v682 = vsel %vm666, %v571, -inf
    %v683 = vsel %vm667, %v572, -inf
    %v684 = vsel %vm668, %v573, -inf
    %v685 = vsel %vm669, %v574, -inf
    %v686 = vsel %vm670, %v575, -inf
    %v687 = vsel %vm671, %v576, -inf
    %v688 = vsel %vm672, %v577, -inf
    %v689 = vsel %vm673, %v578, -inf
    %v690 = vsel %vm674, %v579, -inf
    %v691 = vld [vmem:[#allocation2] sm:$0xff]
    %v692 = vld [vmem:[#allocation2 + $0x8] sm:$0xff]
    %v693 = vld [vmem:[#allocation2 + $0x10] sm:$0xff]
    %v694 = vld [vmem:[#allocation2 + $0x18] sm:$0xff]
    %v695 = vld [vmem:[#allocation2 + $0x20] sm:$0xff]
    %v696 = vld [vmem:[#allocation2 + $0x28] sm:$0xff]
    %v697 = vld [vmem:[#allocation2 + $0x30] sm:$0xff]
    %v698 = vld [vmem:[#allocation2 + $0x38] sm:$0xff]
    %v699 = vld [vmem:[#allocation2 + $0x40] sm:$0xff]
    %v700 = vld [vmem:[#allocation2 + $0x48] sm:$0xff]
    %v701 = vld [vmem:[#allocation2 + $0x50] sm:$0xff]
    %v702 = vld [vmem:[#allocation2 + $0x58] sm:$0xff]
    %v703 = vld [vmem:[#allocation2 + $0x60] sm:$0xff]
    %v704 = vld [vmem:[#allocation2 + $0x68] sm:$0xff]
    %v705 = vld [vmem:[#allocation2 + $0x70] sm:$0xff]
    %v706 = vld [vmem:[#allocation2 + $0x78] sm:$0xff]
    %707 = vmax.xlane.f32.xlu0 %v675
    %v708 = vpop.xlane.xlu0 %707
    %709 = vmax.xlane.f32.xlu0 %v676
    %v710 = vpop.xlane.xlu0 %709
    %711 = vmax.xlane.f32.xlu0 %v677
    %v712 = vpop.xlane.xlu0 %711
    %713 = vmax.xlane.f32.xlu0 %v678
    %v714 = vpop.xlane.xlu0 %713
    %715 = vmax.xlane.f32.xlu0 %v679
    %v716 = vpop.xlane.xlu0 %715
    %717 = vmax.xlane.f32.xlu0 %v680
    %v718 = vpop.xlane.xlu0 %717
    %719 = vmax.xlane.f32.xlu0 %v681
    %v720 = vpop.xlane.xlu0 %719
    %721 = vmax.xlane.f32.xlu0 %v682
    %v722 = vpop.xlane.xlu0 %721
    %723 = vmax.xlane.f32.xlu0 %v683
    %v724 = vpop.xlane.xlu0 %723
    %725 = vmax.xlane.f32.xlu0 %v684
    %v726 = vpop.xlane.xlu0 %725
    %727 = vmax.xlane.f32.xlu0 %v685
    %v728 = vpop.xlane.xlu0 %727
    %729 = vmax.xlane.f32.xlu0 %v686
    %v730 = vpop.xlane.xlu0 %729
    %731 = vmax.xlane.f32.xlu0 %v687
    %v732 = vpop.xlane.xlu0 %731
    %733 = vmax.xlane.f32.xlu0 %v688
    %v734 = vpop.xlane.xlu0 %733
    %735 = vmax.xlane.f32.xlu0 %v689
    %v736 = vpop.xlane.xlu0 %735
    %737 = vmax.xlane.f32.xlu0 %v690
    %v738 = vpop.xlane.xlu0 %737
    %v739 = vmax.f32 %v691, %v708
    %v740 = vmax.f32 %v692, %v710
    %v741 = vmax.f32 %v693, %v712
    %v742 = vmax.f32 %v694, %v714
    %v743 = vmax.f32 %v695, %v716
    %v744 = vmax.f32 %v696, %v718
    %v745 = vmax.f32 %v697, %v720
    %v746 = vmax.f32 %v698, %v722
    %v747 = vmax.f32 %v699, %v724
    %v748 = vmax.f32 %v700, %v726
    %v749 = vmax.f32 %v701, %v728
    %v750 = vmax.f32 %v702, %v730
    %v751 = vmax.f32 %v703, %v732
    %v752 = vmax.f32 %v704, %v734
    %v753 = vmax.f32 %v705, %v736
    %v754 = vmax.f32 %v706, %v738
    %vm755 = vcmask 7168
    %756 = vst.msk [vmem:[#allocation2] sm:$0xff] %vm755, %v739
    %757 = vst.msk [vmem:[#allocation2 + $0x8] sm:$0xff] %vm755, %v740
    %758 = vst.msk [vmem:[#allocation2 + $0x10] sm:$0xff] %vm755, %v741
    %759 = vst.msk [vmem:[#allocation2 + $0x18] sm:$0xff] %vm755, %v742
    %760 = vst.msk [vmem:[#allocation2 + $0x20] sm:$0xff] %vm755, %v743
    %761 = vst.msk [vmem:[#allocation2 + $0x28] sm:$0xff] %vm755, %v744
    %762 = vst.msk [vmem:[#allocation2 + $0x30] sm:$0xff] %vm755, %v745
    %763 = vst.msk [vmem:[#allocation2 + $0x38] sm:$0xff] %vm755, %v746
    %764 = vst.msk [vmem:[#allocation2 + $0x40] sm:$0xff] %vm755, %v747
    %765 = vst.msk [vmem:[#allocation2 + $0x48] sm:$0xff] %vm755, %v748
    %766 = vst.msk [vmem:[#allocation2 + $0x50] sm:$0xff] %vm755, %v749
    %767 = vst.msk [vmem:[#allocation2 + $0x58] sm:$0xff] %vm755, %v750
    %768 = vst.msk [vmem:[#allocation2 + $0x60] sm:$0xff] %vm755, %v751
    %769 = vst.msk [vmem:[#allocation2 + $0x68] sm:$0xff] %vm755, %v752
    %770 = vst.msk [vmem:[#allocation2 + $0x70] sm:$0xff] %vm755, %v753
    %771 = vst.msk [vmem:[#allocation2 + $0x78] sm:$0xff] %vm755, %v754
  $region45: #{triplet_loss.1} parent=0 // pred_fallthru
    _
  // Predicated region
  $region46: #{triplet_loss.1} parent=0 // pred_check
    %p772 = pneg %p586
  $region47: #{triplet_loss.1} parent=0 // pred_check_branch
    %774 = sbr.rel (%p772) target = $region49
  $region48: #{triplet_loss.1} parent=0 // pred_region
    %v775 = vld [vmem:[#allocation2] sm:$0xff]
    %v776 = vld [vmem:[#allocation2 + $0x8] sm:$0xff]
    %v777 = vld [vmem:[#allocation2 + $0x10] sm:$0xff]
    %v778 = vld [vmem:[#allocation2 + $0x18] sm:$0xff]
    %v779 = vld [vmem:[#allocation2 + $0x20] sm:$0xff]
    %v780 = vld [vmem:[#allocation2 + $0x28] sm:$0xff]
    %v781 = vld [vmem:[#allocation2 + $0x30] sm:$0xff]
    %v782 = vld [vmem:[#allocation2 + $0x38] sm:$0xff]
    %v783 = vld [vmem:[#allocation2 + $0x40] sm:$0xff]
    %v784 = vld [vmem:[#allocation2 + $0x48] sm:$0xff]
    %v785 = vld [vmem:[#allocation2 + $0x50] sm:$0xff]
    %v786 = vld [vmem:[#allocation2 + $0x58] sm:$0xff]
    %v787 = vld [vmem:[#allocation2 + $0x60] sm:$0xff]
    %v788 = vld [vmem:[#allocation2 + $0x68] sm:$0xff]
    %v789 = vld [vmem:[#allocation2 + $0x70] sm:$0xff]
    %v790 = vld [vmem:[#allocation2 + $0x78] sm:$0xff]
    %791 = vmax.xlane.f32.xlu0 %v564
    %v792 = vpop.xlane.xlu0 %791
    %793 = vmax.xlane.f32.xlu0 %v565
    %v794 = vpop.xlane.xlu0 %793
    %795 = vmax.xlane.f32.xlu0 %v566
    %v796 = vpop.xlane.xlu0 %795
    %797 = vmax.xlane.f32.xlu0 %v567
    %v798 = vpop.xlane.xlu0 %797
    %799 = vmax.xlane.f32.xlu0 %v568
    %v800 = vpop.xlane.xlu0 %799
    %801 = vmax.xlane.f32.xlu0 %v569
    %v802 = vpop.xlane.xlu0 %801
    %803 = vmax.xlane.f32.xlu0 %v570
    %v804 = vpop.xlane.xlu0 %803
    %805 = vmax.xlane.f32.xlu0 %v571
    %v806 = vpop.xlane.xlu0 %805
    %807 = vmax.xlane.f32.xlu0 %v572
    %v808 = vpop.xlane.xlu0 %807
    %809 = vmax.xlane.f32.xlu0 %v573
    %v810 = vpop.xlane.xlu0 %809
    %811 = vmax.xlane.f32.xlu0 %v574
    %v812 = vpop.xlane.xlu0 %811
    %813 = vmax.xlane.f32.xlu0 %v575
    %v814 = vpop.xlane.xlu0 %813
    %815 = vmax.xlane.f32.xlu0 %v576
    %v816 = vpop.xlane.xlu0 %815
    %817 = vmax.xlane.f32.xlu0 %v577
    %v818 = vpop.xlane.xlu0 %817
    %819 = vmax.xlane.f32.xlu0 %v578
    %v820 = vpop.xlane.xlu0 %819
    %821 = vmax.xlane.f32.xlu0 %v579
    %v822 = vpop.xlane.xlu0 %821
    %v823 = vmax.f32 %v775, %v792
    %v824 = vmax.f32 %v776, %v794
    %v825 = vmax.f32 %v777, %v796
    %v826 = vmax.f32 %v778, %v798
    %v827 = vmax.f32 %v779, %v800
    %v828 = vmax.f32 %v780, %v802
    %v829 = vmax.f32 %v781, %v804
    %v830 = vmax.f32 %v782, %v806
    %v831 = vmax.f32 %v783, %v808
    %v832 = vmax.f32 %v784, %v810
    %v833 = vmax.f32 %v785, %v812
    %v834 = vmax.f32 %v786, %v814
    %v835 = vmax.f32 %v787, %v816
    %v836 = vmax.f32 %v788, %v818
    %v837 = vmax.f32 %v789, %v820
    %v838 = vmax.f32 %v790, %v822
    %vm839 = vcmask 7168
    %840 = vst.msk [vmem:[#allocation2] sm:$0xff] %vm839, %v823
    %841 = vst.msk [vmem:[#allocation2 + $0x8] sm:$0xff] %vm839, %v824
    %842 = vst.msk [vmem:[#allocation2 + $0x10] sm:$0xff] %vm839, %v825
    %843 = vst.msk [vmem:[#allocation2 + $0x18] sm:$0xff] %vm839, %v826
    %844 = vst.msk [vmem:[#allocation2 + $0x20] sm:$0xff] %vm839, %v827
    %845 = vst.msk [vmem:[#allocation2 + $0x28] sm:$0xff] %vm839, %v828
    %846 = vst.msk [vmem:[#allocation2 + $0x30] sm:$0xff] %vm839, %v829
    %847 = vst.msk [vmem:[#allocation2 + $0x38] sm:$0xff] %vm839, %v830
    %848 = vst.msk [vmem:[#allocation2 + $0x40] sm:$0xff] %vm839, %v831
    %849 = vst.msk [vmem:[#allocation2 + $0x48] sm:$0xff] %vm839, %v832
    %850 = vst.msk [vmem:[#allocation2 + $0x50] sm:$0xff] %vm839, %v833
    %851 = vst.msk [vmem:[#allocation2 + $0x58] sm:$0xff] %vm839, %v834
    %852 = vst.msk [vmem:[#allocation2 + $0x60] sm:$0xff] %vm839, %v835
    %853 = vst.msk [vmem:[#allocation2 + $0x68] sm:$0xff] %vm839, %v836
    %854 = vst.msk [vmem:[#allocation2 + $0x70] sm:$0xff] %vm839, %v837
    %855 = vst.msk [vmem:[#allocation2 + $0x78] sm:$0xff] %vm839, %v838
  $region49: #{triplet_loss.1} parent=0 // pred_fallthru
    _
  %v856 = vsel %vm548, inf, %v443
  %v857 = vsel %vm549, inf, %v444
  %v858 = vsel %vm550, inf, %v445
  %v859 = vsel %vm551, inf, %v446
  %v860 = vsel %vm552, inf, %v447
  %v861 = vsel %vm553, inf, %v448
  %v862 = vsel %vm554, inf, %v449
  %v863 = vsel %vm555, inf, %v450
  %v864 = vsel %vm556, inf, %v451
  %v865 = vsel %vm557, inf, %v452
  %v866 = vsel %vm558, inf, %v453
  %v867 = vsel %vm559, inf, %v454
  %v868 = vsel %vm560, inf, %v455
  %v869 = vsel %vm561, inf, %v456
  %v870 = vsel %vm562, inf, %v457
  %v871 = vsel %vm563, inf, %v458
  %v872 = vld [vmem:[#allocation3] sm:$0xff]
  %v873 = vld [vmem:[#allocation3 + $0x8] sm:$0xff]
  %v874 = vld [vmem:[#allocation3 + $0x10] sm:$0xff]
  %v875 = vld [vmem:[#allocation3 + $0x18] sm:$0xff]
  %v876 = vld [vmem:[#allocation3 + $0x20] sm:$0xff]
  %v877 = vld [vmem:[#allocation3 + $0x28] sm:$0xff]
  %v878 = vld [vmem:[#allocation3 + $0x30] sm:$0xff]
  %v879 = vld [vmem:[#allocation3 + $0x38] sm:$0xff]
  %v880 = vld [vmem:[#allocation3 + $0x40] sm:$0xff]
  %v881 = vld [vmem:[#allocation3 + $0x48] sm:$0xff]
  %v882 = vld [vmem:[#allocation3 + $0x50] sm:$0xff]
  %v883 = vld [vmem:[#allocation3 + $0x58] sm:$0xff]
  %v884 = vld [vmem:[#allocation3 + $0x60] sm:$0xff]
  %v885 = vld [vmem:[#allocation3 + $0x68] sm:$0xff]
  %v886 = vld [vmem:[#allocation3 + $0x70] sm:$0xff]
  %v887 = vld [vmem:[#allocation3 + $0x78] sm:$0xff]
  %888 = vmin.xlane.f32.xlu0 %v856
  %v889 = vpop.xlane.xlu0 %888
  %890 = vmin.xlane.f32.xlu0 %v857
  %v891 = vpop.xlane.xlu0 %890
  %892 = vmin.xlane.f32.xlu0 %v858
  %v893 = vpop.xlane.xlu0 %892
  %894 = vmin.xlane.f32.xlu0 %v859
  %v895 = vpop.xlane.xlu0 %894
  %896 = vmin.xlane.f32.xlu0 %v860
  %v897 = vpop.xlane.xlu0 %896
  %898 = vmin.xlane.f32.xlu0 %v861
  %v899 = vpop.xlane.xlu0 %898
  %900 = vmin.xlane.f32.xlu0 %v862
  %v901 = vpop.xlane.xlu0 %900
  %902 = vmin.xlane.f32.xlu0 %v863
  %v903 = vpop.xlane.xlu0 %902
  %904 = vmin.xlane.f32.xlu0 %v864
  %v905 = vpop.xlane.xlu0 %904
  %906 = vmin.xlane.f32.xlu0 %v865
  %v907 = vpop.xlane.xlu0 %906
  %908 = vmin.xlane.f32.xlu0 %v866
  %v909 = vpop.xlane.xlu0 %908
  %910 = vmin.xlane.f32.xlu0 %v867
  %v911 = vpop.xlane.xlu0 %910
  %912 = vmin.xlane.f32.xlu0 %v868
  %v913 = vpop.xlane.xlu0 %912
  %914 = vmin.xlane.f32.xlu0 %v869
  %v915 = vpop.xlane.xlu0 %914
  %916 = vmin.xlane.f32.xlu0 %v870
  %v917 = vpop.xlane.xlu0 %916
  %918 = vmin.xlane.f32.xlu0 %v871
  %v919 = vpop.xlane.xlu0 %918
  %v920 = vmin.f32 %v872, %v889
  %v921 = vmin.f32 %v873, %v891
  %v922 = vmin.f32 %v874, %v893
  %v923 = vmin.f32 %v875, %v895
  %v924 = vmin.f32 %v876, %v897
  %v925 = vmin.f32 %v877, %v899
  %v926 = vmin.f32 %v878, %v901
  %v927 = vmin.f32 %v879, %v903
  %v928 = vmin.f32 %v880, %v905
  %v929 = vmin.f32 %v881, %v907
  %v930 = vmin.f32 %v882, %v909
  %v931 = vmin.f32 %v883, %v911
  %v932 = vmin.f32 %v884, %v913
  %v933 = vmin.f32 %v885, %v915
  %v934 = vmin.f32 %v886, %v917
  %v935 = vmin.f32 %v887, %v919
  %vm936 = vcmask 7168
  %937 = vst.msk [vmem:[#allocation3] sm:$0xff] %vm936, %v920
  %938 = vst.msk [vmem:[#allocation3 + $0x8] sm:$0xff] %vm936, %v921
  %939 = vst.msk [vmem:[#allocation3 + $0x10] sm:$0xff] %vm936, %v922
  %940 = vst.msk [vmem:[#allocation3 + $0x18] sm:$0xff] %vm936, %v923
  %941 = vst.msk [vmem:[#allocation3 + $0x20] sm:$0xff] %vm936, %v924
  %942 = vst.msk [vmem:[#allocation3 + $0x28] sm:$0xff] %vm936, %v925
  %943 = vst.msk [vmem:[#allocation3 + $0x30] sm:$0xff] %vm936, %v926
  %944 = vst.msk [vmem:[#allocation3 + $0x38] sm:$0xff] %vm936, %v927
  %945 = vst.msk [vmem:[#allocation3 + $0x40] sm:$0xff] %vm936, %v928
  %946 = vst.msk [vmem:[#allocation3 + $0x48] sm:$0xff] %vm936, %v929
  %947 = vst.msk [vmem:[#allocation3 + $0x50] sm:$0xff] %vm936, %v930
  %948 = vst.msk [vmem:[#allocation3 + $0x58] sm:$0xff] %vm936, %v931
  %949 = vst.msk [vmem:[#allocation3 + $0x60] sm:$0xff] %vm936, %v932
  %950 = vst.msk [vmem:[#allocation3 + $0x68] sm:$0xff] %vm936, %v933
  %951 = vst.msk [vmem:[#allocation3 + $0x70] sm:$0xff] %vm936, %v934
  %952 = vst.msk [vmem:[#allocation3 + $0x78] sm:$0xff] %vm936, %v935
  // Predicated region
  $region50: #{triplet_loss.1} parent=0 // pred_check
    %p953 = pneg %p30
  $region51: #{triplet_loss.1} parent=0 // pred_check_branch
    %955 = sbr.rel (%p953) target = $region53
  $region52: #{triplet_loss.1} parent=0 // pred_region
    %v956 = vld [vmem:[#allocation2] sm:$0xff]
    %v957 = vld [vmem:[#allocation2 + $0x8] sm:$0xff]
    %v958 = vld [vmem:[#allocation2 + $0x10] sm:$0xff]
    %v959 = vld [vmem:[#allocation2 + $0x18] sm:$0xff]
    %v960 = vld [vmem:[#allocation2 + $0x20] sm:$0xff]
    %v961 = vld [vmem:[#allocation2 + $0x28] sm:$0xff]
    %v962 = vld [vmem:[#allocation2 + $0x30] sm:$0xff]
    %v963 = vld [vmem:[#allocation2 + $0x38] sm:$0xff]
    %v964 = vld [vmem:[#allocation2 + $0x40] sm:$0xff]
    %v965 = vld [vmem:[#allocation2 + $0x48] sm:$0xff]
    %v966 = vld [vmem:[#allocation2 + $0x50] sm:$0xff]
    %v967 = vld [vmem:[#allocation2 + $0x58] sm:$0xff]
    %v968 = vld [vmem:[#allocation2 + $0x60] sm:$0xff]
    %v969 = vld [vmem:[#allocation2 + $0x68] sm:$0xff]
    %v970 = vld [vmem:[#allocation2 + $0x70] sm:$0xff]
    %v971 = vld [vmem:[#allocation2 + $0x78] sm:$0xff]
    %v972 = vld [vmem:[#allocation3] sm:$0xff]
    %v973 = vld [vmem:[#allocation3 + $0x8] sm:$0xff]
    %v974 = vld [vmem:[#allocation3 + $0x10] sm:$0xff]
    %v975 = vld [vmem:[#allocation3 + $0x18] sm:$0xff]
    %v976 = vld [vmem:[#allocation3 + $0x20] sm:$0xff]
    %v977 = vld [vmem:[#allocation3 + $0x28] sm:$0xff]
    %v978 = vld [vmem:[#allocation3 + $0x30] sm:$0xff]
    %v979 = vld [vmem:[#allocation3 + $0x38] sm:$0xff]
    %v980 = vld [vmem:[#allocation3 + $0x40] sm:$0xff]
    %v981 = vld [vmem:[#allocation3 + $0x48] sm:$0xff]
    %v982 = vld [vmem:[#allocation3 + $0x50] sm:$0xff]
    %v983 = vld [vmem:[#allocation3 + $0x58] sm:$0xff]
    %v984 = vld [vmem:[#allocation3 + $0x60] sm:$0xff]
    %v985 = vld [vmem:[#allocation3 + $0x68] sm:$0xff]
    %v986 = vld [vmem:[#allocation3 + $0x70] sm:$0xff]
    %v987 = vld [vmem:[#allocation3 + $0x78] sm:$0xff]
    %v988 = vld [vmem:[#allocation4] sm:$0xff]
    %v989 = vld [vmem:[#allocation4 + $0x8] sm:$0xff]
    %v990 = vld [vmem:[#allocation4 + $0x10] sm:$0xff]
    %v991 = vld [vmem:[#allocation4 + $0x18] sm:$0xff]
    %v992 = vld [vmem:[#allocation4 + $0x20] sm:$0xff]
    %v993 = vld [vmem:[#allocation4 + $0x28] sm:$0xff]
    %v994 = vld [vmem:[#allocation4 + $0x30] sm:$0xff]
    %v995 = vld [vmem:[#allocation4 + $0x38] sm:$0xff]
    %v996 = vld [vmem:[#allocation4 + $0x40] sm:$0xff]
    %v997 = vld [vmem:[#allocation4 + $0x48] sm:$0xff]
    %v998 = vld [vmem:[#allocation4 + $0x50] sm:$0xff]
    %v999 = vld [vmem:[#allocation4 + $0x58] sm:$0xff]
    %v1000 = vld [vmem:[#allocation4 + $0x60] sm:$0xff]
    %v1001 = vld [vmem:[#allocation4 + $0x68] sm:$0xff]
    %v1002 = vld [vmem:[#allocation4 + $0x70] sm:$0xff]
    %v1003 = vld [vmem:[#allocation4 + $0x78] sm:$0xff]
    %vm1004 = vcmp.eq.f32.partialorder %v956, -inf
    %vm1005 = vcmp.eq.f32.partialorder %v957, -inf
    %vm1006 = vcmp.eq.f32.partialorder %v958, -inf
    %vm1007 = vcmp.eq.f32.partialorder %v959, -inf
    %vm1008 = vcmp.eq.f32.partialorder %v960, -inf
    %vm1009 = vcmp.eq.f32.partialorder %v961, -inf
    %vm1010 = vcmp.eq.f32.partialorder %v962, -inf
    %vm1011 = vcmp.eq.f32.partialorder %v963, -inf
    %vm1012 = vcmp.eq.f32.partialorder %v964, -inf
    %vm1013 = vcmp.eq.f32.partialorder %v965, -inf
    %vm1014 = vcmp.eq.f32.partialorder %v966, -inf
    %vm1015 = vcmp.eq.f32.partialorder %v967, -inf
    %vm1016 = vcmp.eq.f32.partialorder %v968, -inf
    %vm1017 = vcmp.eq.f32.partialorder %v969, -inf
    %vm1018 = vcmp.eq.f32.partialorder %v970, -inf
    %vm1019 = vcmp.eq.f32.partialorder %v971, -inf
    %v1020 = vsel %vm1004, %v988, %v956
    %v1021 = vsel %vm1005, %v989, %v957
    %v1022 = vsel %vm1006, %v990, %v958
    %v1023 = vsel %vm1007, %v991, %v959
    %v1024 = vsel %vm1008, %v992, %v960
    %v1025 = vsel %vm1009, %v993, %v961
    %v1026 = vsel %vm1010, %v994, %v962
    %v1027 = vsel %vm1011, %v995, %v963
    %v1028 = vsel %vm1012, %v996, %v964
    %v1029 = vsel %vm1013, %v997, %v965
    %v1030 = vsel %vm1014, %v998, %v966
    %v1031 = vsel %vm1015, %v999, %v967
    %v1032 = vsel %vm1016, %v1000, %v968
    %v1033 = vsel %vm1017, %v1001, %v969
    %v1034 = vsel %vm1018, %v1002, %v970
    %v1035 = vsel %vm1019, %v1003, %v971
    %vm1036 = vcmp.eq.f32.partialorder %v972, inf
    %vm1037 = vcmp.eq.f32.partialorder %v973, inf
    %vm1038 = vcmp.eq.f32.partialorder %v974, inf
    %vm1039 = vcmp.eq.f32.partialorder %v975, inf
    %vm1040 = vcmp.eq.f32.partialorder %v976, inf
    %vm1041 = vcmp.eq.f32.partialorder %v977, inf
    %vm1042 = vcmp.eq.f32.partialorder %v978, inf
    %vm1043 = vcmp.eq.f32.partialorder %v979, inf
    %vm1044 = vcmp.eq.f32.partialorder %v980, inf
    %vm1045 = vcmp.eq.f32.partialorder %v981, inf
    %vm1046 = vcmp.eq.f32.partialorder %v982, inf
    %vm1047 = vcmp.eq.f32.partialorder %v983, inf
    %vm1048 = vcmp.eq.f32.partialorder %v984, inf
    %vm1049 = vcmp.eq.f32.partialorder %v985, inf
    %vm1050 = vcmp.eq.f32.partialorder %v986, inf
    %vm1051 = vcmp.eq.f32.partialorder %v987, inf
    %v1052 = vsel %vm1036, %v988, %v972
    %v1053 = vsel %vm1037, %v989, %v973
    %v1054 = vsel %vm1038, %v990, %v974
    %v1055 = vsel %vm1039, %v991, %v975
    %v1056 = vsel %vm1040, %v992, %v976
    %v1057 = vsel %vm1041, %v993, %v977
    %v1058 = vsel %vm1042, %v994, %v978
    %v1059 = vsel %vm1043, %v995, %v979
    %v1060 = vsel %vm1044, %v996, %v980
    %v1061 = vsel %vm1045, %v997, %v981
    %v1062 = vsel %vm1046, %v998, %v982
    %v1063 = vsel %vm1047, %v999, %v983
    %v1064 = vsel %vm1048, %v1000, %v984
    %v1065 = vsel %vm1049, %v1001, %v985
    %v1066 = vsel %vm1050, %v1002, %v986
    %v1067 = vsel %vm1051, %v1003, %v987
    %v1068 = vsub.f32 %v1020, %v1052
    %v1069 = vsub.f32 %v1021, %v1053
    %v1070 = vsub.f32 %v1022, %v1054
    %v1071 = vsub.f32 %v1023, %v1055
    %v1072 = vsub.f32 %v1024, %v1056
    %v1073 = vsub.f32 %v1025, %v1057
    %v1074 = vsub.f32 %v1026, %v1058
    %v1075 = vsub.f32 %v1027, %v1059
    %v1076 = vsub.f32 %v1028, %v1060
    %v1077 = vsub.f32 %v1029, %v1061
    %v1078 = vsub.f32 %v1030, %v1062
    %v1079 = vsub.f32 %v1031, %v1063
    %v1080 = vsub.f32 %v1032, %v1064
    %v1081 = vsub.f32 %v1033, %v1065
    %v1082 = vsub.f32 %v1034, %v1066
    %v1083 = vsub.f32 %v1035, %v1067
    %v1084 = vadd.f32 %v1068, 0.5
    %v1085 = vadd.f32 %v1069, 0.5
    %v1086 = vadd.f32 %v1070, 0.5
    %v1087 = vadd.f32 %v1071, 0.5
    %v1088 = vadd.f32 %v1072, 0.5
    %v1089 = vadd.f32 %v1073, 0.5
    %v1090 = vadd.f32 %v1074, 0.5
    %v1091 = vadd.f32 %v1075, 0.5
    %v1092 = vadd.f32 %v1076, 0.5
    %v1093 = vadd.f32 %v1077, 0.5
    %v1094 = vadd.f32 %v1078, 0.5
    %v1095 = vadd.f32 %v1079, 0.5
    %v1096 = vadd.f32 %v1080, 0.5
    %v1097 = vadd.f32 %v1081, 0.5
    %v1098 = vadd.f32 %v1082, 0.5
    %v1099 = vadd.f32 %v1083, 0.5
    %v1100 = vmax.f32 %v1084, 0.0
    %v1101 = vmax.f32 %v1085, 0.0
    %v1102 = vmax.f32 %v1086, 0.0
    %v1103 = vmax.f32 %v1087, 0.0
    %v1104 = vmax.f32 %v1088, 0.0
    %v1105 = vmax.f32 %v1089, 0.0
    %v1106 = vmax.f32 %v1090, 0.0
    %v1107 = vmax.f32 %v1091, 0.0
    %v1108 = vmax.f32 %v1092, 0.0
    %v1109 = vmax.f32 %v1093, 0.0
    %v1110 = vmax.f32 %v1094, 0.0
    %v1111 = vmax.f32 %v1095, 0.0
    %v1112 = vmax.f32 %v1096, 0.0
    %v1113 = vmax.f32 %v1097, 0.0
    %v1114 = vmax.f32 %v1098, 0.0
    %v1115 = vmax.f32 %v1099, 0.0
    %1116 = vst.msk [vmem:[%s8] sm:$0xff] %vm936, %v1100
    %1117 = vst.msk [vmem:[%s8 + $0x8] sm:$0xff] %vm936, %v1101
    %1118 = vst.msk [vmem:[%s8 + $0x10] sm:$0xff] %vm936, %v1102
    %1119 = vst.msk [vmem:[%s8 + $0x18] sm:$0xff] %vm936, %v1103
    %1120 = vst.msk [vmem:[%s8 + $0x20] sm:$0xff] %vm936, %v1104
    %1121 = vst.msk [vmem:[%s8 + $0x28] sm:$0xff] %vm936, %v1105
    %1122 = vst.msk [vmem:[%s8 + $0x30] sm:$0xff] %vm936, %v1106
    %1123 = vst.msk [vmem:[%s8 + $0x38] sm:$0xff] %vm936, %v1107
    %1124 = vst.msk [vmem:[%s8 + $0x40] sm:$0xff] %vm936, %v1108
    %1125 = vst.msk [vmem:[%s8 + $0x48] sm:$0xff] %vm936, %v1109
    %1126 = vst.msk [vmem:[%s8 + $0x50] sm:$0xff] %vm936, %v1110
    %1127 = vst.msk [vmem:[%s8 + $0x58] sm:$0xff] %vm936, %v1111
    %1128 = vst.msk [vmem:[%s8 + $0x60] sm:$0xff] %vm936, %v1112
    %1129 = vst.msk [vmem:[%s8 + $0x68] sm:$0xff] %vm936, %v1113
    %1130 = vst.msk [vmem:[%s8 + $0x70] sm:$0xff] %vm936, %v1114
    %1131 = vst.msk [vmem:[%s8 + $0x78] sm:$0xff] %vm936, %v1115
  $region53: #{triplet_loss.1} parent=0 // pred_fallthru
    _
  // Predicated region
  $region54: #{triplet_loss.1} parent=0 // pred_check
    _
  $region55: #{triplet_loss.1} parent=0 // pred_check_branch
    %1133 = sbr.rel (0) target = $region57
  $region56: #{triplet_loss.1} parent=0 // pred_region
    _
  $region57: #{triplet_loss.1} parent=0 // pred_fallthru
    _
  // Predicated region
  $region58: #{triplet_loss.1} parent=0 // pred_check
    _
  $region59: #{triplet_loss.1} parent=0 // pred_check_branch
    %1135 = sbr.rel (0) target = $region61
  $region60: #{triplet_loss.1} parent=0 // pred_region
    _
  $region61: #{triplet_loss.1} parent=0 // pred_fallthru
    _

</llo_original>
